<compile_context>
chip_gen: v7x
topology: tpu7x:2x2x1
jax: 0.10.0
libtpu: 0.0.40
codegen_flags: <defaults>
</compile_context>

<pallas_src>
import functools

import jax
import jax.numpy as jnp
from jax import lax
from jax.experimental import pallas as pl
from jax.experimental.pallas import tpu as pltpu


def _as_pair(v):
    if isinstance(v, (tuple, list)):
        assert len(v) == 2, "only 2D convs are supported"
        return (int(v[0]), int(v[1]))
    return (int(v), int(v))


def _fused_kernel(*refs, Kh, Kw, Wp, L, inv_count, eps, has_dropout, dropout_p,
                  use_norm, use_nonlin, negative_slope, nonlin_first):
    """One grid step = one batch sample.

    refs (in order):
      x_ref     : (1, Cin, Lin)   padded + flattened sample (Lin = Hp*Wp + Kw-1)
      w_ref     : (Kh*Kw, Cout, Cin) per-tap weight matrices
      b_ref     : (Cout, 1) f32   conv bias (zeros if disabled)
      g_ref     : (Cout, 1) f32   norm scale (ones if disabled / not affine)
      beta_ref  : (Cout, 1) f32   norm shift (zeros if disabled)
      valid_ref : (1, L) f32      1.0 on real (strided) output positions
      u_ref     : (1, Cout, L) f32 dropout uniforms   [only when dropout active]
      o_ref     : (1, Cout, L)    output (stride-1 conv on padded-width rows)
    """
    if has_dropout:
        x_ref, w_ref, b_ref, g_ref, beta_ref, valid_ref, u_ref, o_ref = refs
    else:
        x_ref, w_ref, b_ref, g_ref, beta_ref, valid_ref, o_ref = refs
        u_ref = None

    cout = o_ref.shape[1]
    x = x_ref[0]                      # (Cin, Lin)
    valid = valid_ref[...]            # (1, L)

    # ---- Convolution: accumulate Kh*Kw shifted matmuls (f32 accumulator).
    acc = jnp.zeros((cout, L), dtype=jnp.float32)
    for kh in range(Kh):
        for kw in range(Kw):
            tap = kh * Kw + kw
            off = kh * Wp + kw                       # static lane offset
            patch = x[:, off:off + L]                # (Cin, L) contiguous slice
            acc = acc + jnp.dot(w_ref[tap], patch,
                                preferred_element_type=jnp.float32)
    acc = acc + b_ref[...]                           # (Cout,1) broadcast

    # ---- Dropout (inverted scaling; identity when disabled).
    if has_dropout:
        keep = (u_ref[0] >= jnp.float32(dropout_p)).astype(jnp.float32)
        acc = acc * keep * jnp.float32(1.0 / (1.0 - dropout_p))

    def _norm(a):
        # InstanceNorm2d over the valid (strided) spatial positions only.
        mean = jnp.sum(a * valid, axis=1, keepdims=True) * jnp.float32(inv_count)
        cent = a - mean
        var = jnp.sum(cent * cent * valid, axis=1,
                      keepdims=True) * jnp.float32(inv_count)
        inv = lax.rsqrt(var + jnp.float32(eps))
        return cent * inv * g_ref[...] + beta_ref[...]

    def _act(a):
        return jnp.where(a >= 0, a, jnp.float32(negative_slope) * a)

    if use_norm and use_nonlin and nonlin_first:
        acc = _norm(_act(acc))
    else:
        if use_norm:
            acc = _norm(acc)
        if use_nonlin:
            acc = _act(acc)

    o_ref[0] = acc.astype(o_ref.dtype)


def conv_dropout_norm_relu(
    x, weight, bias=None, gamma=None, beta=None, *,
    stride=1, eps=1e-5, dropout_p=0.0, use_norm=True, use_nonlin=True,
    negative_slope=0.01, nonlin_first=False, training=False,
    dropout_key=None, dropout_uniforms=None,
):
    """Fused Conv2d -> Dropout -> InstanceNorm2d -> LeakyReLU on NCHW input."""
    N, Cin, H, W = x.shape
    Cout, Cin_w, Kh, Kw = weight.shape
    assert Cin_w == Cin, "weight/input channel mismatch"
    sh, sw = _as_pair(stride)
    if Kh % 2 == 0 or Kw % 2 == 0:
        raise NotImplementedError("only odd kernel sizes are supported")

    # Pad input channels to a multiple of 8 (sublane-friendly matmul K dim).
    Cin_p = ((Cin + 7) // 8) * 8
    if Cin_p != Cin:
        x = jnp.pad(x, ((0, 0), (0, Cin_p - Cin), (0, 0), (0, 0)))
        weight = jnp.pad(weight, ((0, 0), (0, Cin_p - Cin), (0, 0), (0, 0)))

    ph, pw = (Kh - 1) // 2, (Kw - 1) // 2
    Hp, Wp = H + 2 * ph, W + 2 * pw
    L = H * Wp                         # stride-1 conv on padded-width rows
    Lin = Hp * Wp + (Kw - 1)           # flat padded sample + tail for the last tap
    Ho, Wo = -(-H // sh), -(-W // sw)  # PyTorch output size for pad=(k-1)//2

    # Lane-dense flattened input: (N, Cin_p, Lin).
    xp = jnp.pad(x, ((0, 0), (0, 0), (ph, ph), (pw, pw))).reshape(N, Cin_p, Hp * Wp)
    xp = jnp.pad(xp, ((0, 0), (0, 0), (0, Kw - 1)))

    # Per-tap weight matrices, in the input dtype (bf16 stays bf16 on the MXU).
    w_taps = jnp.transpose(weight, (2, 3, 0, 1)).reshape(Kh * Kw, Cout, Cin_p)
    w_taps = w_taps.astype(x.dtype)

    b = (jnp.zeros((Cout,), jnp.float32) if bias is None
         else bias.astype(jnp.float32)).reshape(Cout, 1)
    g = (jnp.ones((Cout,), jnp.float32) if gamma is None
         else gamma.astype(jnp.float32)).reshape(Cout, 1)
    bt = (jnp.zeros((Cout,), jnp.float32) if beta is None
          else beta.astype(jnp.float32)).reshape(Cout, 1)

    # Valid-position mask: drops padded-width garbage columns and applies the
    # conv stride so the norm statistics match the strided output exactly.
    pos = jnp.arange(L, dtype=jnp.int32)
    hh, ww = pos // Wp, pos % Wp
    valid = ((ww < W) & (hh % sh == 0) & (ww % sw == 0)).astype(jnp.float32)
    valid = valid.reshape(1, L)

    has_dropout = (float(dropout_p) > 0.0) and training
    if has_dropout:
        if dropout_uniforms is None:
            if dropout_key is None:
                raise ValueError("dropout_key is required when dropout is active")
            dropout_uniforms = jax.random.uniform(
                dropout_key, (N, Cout, L), jnp.float32)
        u = dropout_uniforms

    kernel = functools.partial(
        _fused_kernel, Kh=Kh, Kw=Kw, Wp=Wp, L=L,
        inv_count=1.0 / float(Ho * Wo), eps=float(eps),
        has_dropout=has_dropout, dropout_p=float(dropout_p),
        use_norm=bool(use_norm), use_nonlin=bool(use_nonlin),
        negative_slope=float(negative_slope), nonlin_first=bool(nonlin_first),
    )

    inputs = [xp, w_taps, b, g, bt, valid]
    in_specs = [
        pl.BlockSpec((1, Cin_p, Lin), lambda n: (n, 0, 0)),
        pl.BlockSpec((Kh * Kw, Cout, Cin_p), lambda n: (0, 0, 0)),
        pl.BlockSpec((Cout, 1), lambda n: (0, 0)),
        pl.BlockSpec((Cout, 1), lambda n: (0, 0)),
        pl.BlockSpec((Cout, 1), lambda n: (0, 0)),
        pl.BlockSpec((1, L), lambda n: (0, 0)),
    ]
    if has_dropout:
        inputs.append(u)
        in_specs.append(pl.BlockSpec((1, Cout, L), lambda n: (n, 0, 0)))

    # Explicit VMEM budget (v7x only has 64 MiB physical): double-buffered
    # in/out blocks + weights + f32 accumulator, with headroom.
    itemsize = jnp.dtype(x.dtype).itemsize
    block_bytes = (Cin_p * Lin * itemsize + Kh * Kw * Cout * Cin_p * itemsize
                   + Cout * L * itemsize + Cout * L * 4 + L * 4 + 3 * Cout * 4
                   + (Cout * L * 4 if has_dropout else 0))
    vmem_limit = int(min(max(6 * block_bytes, 32 * 2 ** 20), 64 * 2 ** 20))

    y_flat = pl.pallas_call(
        kernel,
        out_shape=jax.ShapeDtypeStruct((N, Cout, L), x.dtype),
        grid=(N,),
        in_specs=in_specs,
        out_specs=pl.BlockSpec((1, Cout, L), lambda n: (n, 0, 0)),
        compiler_params=pltpu.CompilerParams(
            dimension_semantics=("parallel",),
            vmem_limit_bytes=vmem_limit,
        ),
    )(*inputs)

    # Free bitcast reshape + cheap strided slice: drop padded-width garbage
    # columns and apply the conv stride.
    y = y_flat.reshape(N, Cout, H, Wp)[:, :, ::sh, 0:W:sw]
    return y


class ConvDropoutNormReLU:
    """Pallas-backed Conv2d -> Dropout -> InstanceNorm2d -> LeakyReLU (NCHW)."""

    def __init__(self, input_channels, output_channels, kernel_size=3, stride=1,
                 conv_bias=False, use_norm=True, norm_eps=1e-5, dropout_p=0.0,
                 use_nonlin=True, negative_slope=0.01, nonlin_first=False, *,
                 key, dtype=jnp.float32):
        Kh, Kw = _as_pair(kernel_size)
        self.stride = _as_pair(stride)
        self.eps = float(norm_eps)
        self.dropout_p = float(dropout_p)
        self.use_norm = bool(use_norm)
        self.use_nonlin = bool(use_nonlin)
        self.negative_slope = float(negative_slope)
        self.nonlin_first = bool(nonlin_first)

        k_w, k_b = jax.random.split(key)
        fan_in = input_channels * Kh * Kw
        bound = 1.0 / (fan_in ** 0.5)
        self.weight = jax.random.uniform(
            k_w, (output_channels, input_channels, Kh, Kw), dtype, -bound, bound)
        self.bias = (jax.random.uniform(k_b, (output_channels,), dtype,
                                        -bound, bound) if conv_bias else None)
        self.gamma = jnp.ones((output_channels,), dtype) if use_norm else None
        self.beta = jnp.zeros((output_channels,), dtype) if use_norm else None

    def __call__(self, x, *, training=False, dropout_key=None,
                 dropout_uniforms=None):
        return conv_dropout_norm_relu(
            x, self.weight, self.bias, self.gamma, self.beta,
            stride=self.stride, eps=self.eps, dropout_p=self.dropout_p,
            use_norm=self.use_norm, use_nonlin=self.use_nonlin,
            negative_slope=self.negative_slope, nonlin_first=self.nonlin_first,
            training=training, dropout_key=dropout_key,
            dropout_uniforms=dropout_uniforms)


def _reference_forward(x, weight, bias, gamma, beta, *, stride, eps, dropout_p,
                       dropout_mask_uniforms, use_norm, use_nonlin,
                       negative_slope, nonlin_first):
    """Pure-JAX reference (mirrors the PyTorch module)."""
    sh, sw = stride
    Kh, Kw = weight.shape[2:]
    ph, pw = (Kh - 1) // 2, (Kw - 1) // 2
    y = lax.conv_general_dilated(
        x, weight, (sh, sw), ((ph, ph), (pw, pw)),
        dimension_numbers=("NCHW", "OIHW", "NCHW"),
        precision=lax.Precision.HIGHEST)
    if bias is not None:
        y = y + bias.reshape(1, -1, 1, 1)
    if dropout_mask_uniforms is not None and dropout_p > 0.0:
        keep = (dropout_mask_uniforms >= dropout_p).astype(y.dtype)
        y = y * keep / (1.0 - dropout_p)

    def norm(a):
        mean = jnp.mean(a, axis=(2, 3), keepdims=True)
        var = jnp.mean((a - mean) ** 2, axis=(2, 3), keepdims=True)
        return ((a - mean) * lax.rsqrt(var + eps) * gamma.reshape(1, -1, 1, 1)
                + beta.reshape(1, -1, 1, 1))

    def act(a):
        return jnp.where(a >= 0, a, negative_slope * a)

    if use_norm and use_nonlin and nonlin_first:
        y = norm(act(y))
    else:
        if use_norm:
            y = norm(y)
        if use_nonlin:
            y = act(y)
    return y


if __name__ == "__main__":
    root = jax.random.PRNGKey(0)
    k_param, k_x, k_drop = jax.random.split(root, 3)

    N, Cin, Cout, H, W, K = 2, 4, 8, 16, 16, 3
    x = jax.random.normal(k_x, (N, Cin, H, W), jnp.float32)

    # --- Case 1: Conv(bias) + InstanceNorm(affine) + LeakyReLU, no dropout.
    module = ConvDropoutNormReLU(Cin, Cout, kernel_size=K, stride=1,
                                 conv_bias=True, dropout_p=0.0, key=k_param)
    y = jax.block_until_ready(module(x, training=True))
    y_ref = _reference_forward(
        x, module.weight, module.bias, module.gamma, module.beta,
        stride=(1, 1), eps=1e-5, dropout_p=0.0, dropout_mask_uniforms=None,
        use_norm=True, use_nonlin=True, negative_slope=0.01, nonlin_first=False)
    assert y.shape == (N, Cout, H, W)
    assert jnp.allclose(y, y_ref, rtol=1e-3, atol=1e-3), \
        float(jnp.max(jnp.abs(y - y_ref)))

    # --- Case 2: dropout active in training mode (same uniforms fed to ref).
    p = 0.25
    Wp = W + (K - 1)
    u = jax.random.uniform(k_drop, (N, Cout, H * Wp), jnp.float32)
    module_do = ConvDropoutNormReLU(Cin, Cout, kernel_size=K, stride=1,
                                    conv_bias=True, dropout_p=p, key=k_param)
    y_do = jax.block_until_ready(module_do(x, training=True, dropout_uniforms=u))
    u_valid = u.reshape(N, Cout, H, Wp)[:, :, :, :W]
    y_do_ref = _reference_forward(
        x, module_do.weight, module_do.bias, module_do.gamma, module_do.beta,
        stride=(1, 1), eps=1e-5, dropout_p=p, dropout_mask_uniforms=u_valid,
        use_norm=True, use_nonlin=True, negative_slope=0.01, nonlin_first=False)
    assert jnp.allclose(y_do, y_do_ref, rtol=1e-3, atol=1e-3)

    # Eval mode: dropout is identity -> matches the no-dropout output.
    y_eval = jax.block_until_ready(module_do(x, training=False))
    assert jnp.allclose(y_eval, y, rtol=1e-3, atol=1e-3)

    # --- Case 3: strided conv (stride=2), no bias, norm + nonlin.
    module_s2 = ConvDropoutNormReLU(Cin, Cout, kernel_size=K, stride=2,
                                    conv_bias=False, key=k_param)
    y_s2 = jax.block_until_ready(module_s2(x, training=False))
    y_s2_ref = _reference_forward(
        x, module_s2.weight, None, module_s2.gamma, module_s2.beta,
        stride=(2, 2), eps=1e-5, dropout_p=0.0, dropout_mask_uniforms=None,
        use_norm=True, use_nonlin=True, negative_slope=0.01, nonlin_first=False)
    assert y_s2.shape == (N, Cout, H // 2, W // 2)
    assert jnp.allclose(y_s2, y_s2_ref, rtol=1e-3, atol=1e-3)

    print("KERNEL_OK")
</pallas_src>

<mosaic_0001>
module attributes {stable_mosaic.version = 11 : i64} {
  func.func @_fused_kernel(%arg0: i32, %arg1: memref<1x8x326xf32, #tpu.memory_space<vmem>>, %arg2: memref<9x8x8xf32, #tpu.memory_space<vmem>>, %arg3: memref<8x1xf32, #tpu.memory_space<vmem>>, %arg4: memref<8x1xf32, #tpu.memory_space<vmem>>, %arg5: memref<8x1xf32, #tpu.memory_space<vmem>>, %arg6: memref<1x288xf32, #tpu.memory_space<vmem>>, %arg7: memref<1x8x288xf32, #tpu.memory_space<vmem>>) attributes {dimension_semantics = [#tpu.dimension_semantics<parallel>], iteration_bounds = array<i64: 2>, scalar_prefetch = 0 : i64, scratch_operands = 0 : i64, tpu.core_type = #tpu.core_type<tc>, window_params = [{transform_indices = @transform_0, window_bounds = array<i64: 1, 8, 326>}, {pipeline_mode = #tpu.pipeline_mode<synchronous>, transform_indices = @transform_1, window_bounds = array<i64: 9, 8, 8>}, {pipeline_mode = #tpu.pipeline_mode<synchronous>, transform_indices = @transform_2, window_bounds = array<i64: 8, 1>}, {pipeline_mode = #tpu.pipeline_mode<synchronous>, transform_indices = @transform_3, window_bounds = array<i64: 8, 1>}, {pipeline_mode = #tpu.pipeline_mode<synchronous>, transform_indices = @transform_4, window_bounds = array<i64: 8, 1>}, {pipeline_mode = #tpu.pipeline_mode<synchronous>, transform_indices = @transform_5, window_bounds = array<i64: 1, 288>}, {transform_indices = @transform_6, window_bounds = array<i64: 1, 8, 288>}]} {
    %c0 = arith.constant 0 : index
    %c0_0 = arith.constant 0 : index
    %c0_1 = arith.constant 0 : index
    %0 = vector.load %arg1[%c0, %c0_0, %c0_1] : memref<1x8x326xf32, #tpu.memory_space<vmem>>, vector<1x8x326xf32>
    %1 = vector.shape_cast %0 : vector<1x8x326xf32> to vector<8x326xf32>
    %c0_2 = arith.constant 0 : index
    %c0_3 = arith.constant 0 : index
    %2 = vector.load %arg6[%c0_2, %c0_3] : memref<1x288xf32, #tpu.memory_space<vmem>>, vector<1x288xf32>
    %cst = arith.constant 0.000000e+00 : f32
    %3 = vector.broadcast %cst : f32 to vector<8x288xf32>
    %4 = vector.extract_strided_slice %1 {offsets = [0, 0], sizes = [8, 288], strides = [1, 1]} : vector<8x326xf32> to vector<8x288xf32>
    %c0_4 = arith.constant 0 : index
    %c0_5 = arith.constant 0 : index
    %c0_6 = arith.constant 0 : index
    %5 = vector.load %arg2[%c0_4, %c0_5, %c0_6] : memref<9x8x8xf32, #tpu.memory_space<vmem>>, vector<1x8x8xf32>
    %6 = vector.shape_cast %5 : vector<1x8x8xf32> to vector<8x8xf32>
    %cst_7 = arith.constant dense<0.000000e+00> : vector<8x288xf32>
    %7 = tpu.matmul %6, %4, %cst_7 {dimension_numbers = #tpu.dot_dimension_numbers<[1], [0], [0], [1], [0, 0, 1, 1], [], []>} : vector<8x8xf32>, vector<8x288xf32>, vector<8x288xf32> -> vector<8x288xf32>
    %8 = arith.addf %3, %7 : vector<8x288xf32>
    %9 = vector.extract_strided_slice %1 {offsets = [0, 1], sizes = [8, 288], strides = [1, 1]} : vector<8x326xf32> to vector<8x288xf32>
    %c1 = arith.constant 1 : index
    %c0_8 = arith.constant 0 : index
    %c0_9 = arith.constant 0 : index
    %10 = vector.load %arg2[%c1, %c0_8, %c0_9] : memref<9x8x8xf32, #tpu.memory_space<vmem>>, vector<1x8x8xf32>
    %11 = vector.shape_cast %10 : vector<1x8x8xf32> to vector<8x8xf32>
    %cst_10 = arith.constant dense<0.000000e+00> : vector<8x288xf32>
    %12 = tpu.matmul %11, %9, %cst_10 {dimension_numbers = #tpu.dot_dimension_numbers<[1], [0], [0], [1], [0, 0, 1, 1], [], []>} : vector<8x8xf32>, vector<8x288xf32>, vector<8x288xf32> -> vector<8x288xf32>
    %13 = arith.addf %8, %12 : vector<8x288xf32>
    %14 = vector.extract_strided_slice %1 {offsets = [0, 2], sizes = [8, 288], strides = [1, 1]} : vector<8x326xf32> to vector<8x288xf32>
    %c2 = arith.constant 2 : index
    %c0_11 = arith.constant 0 : index
    %c0_12 = arith.constant 0 : index
    %15 = vector.load %arg2[%c2, %c0_11, %c0_12] : memref<9x8x8xf32, #tpu.memory_space<vmem>>, vector<1x8x8xf32>
    %16 = vector.shape_cast %15 : vector<1x8x8xf32> to vector<8x8xf32>
    %cst_13 = arith.constant dense<0.000000e+00> : vector<8x288xf32>
    %17 = tpu.matmul %16, %14, %cst_13 {dimension_numbers = #tpu.dot_dimension_numbers<[1], [0], [0], [1], [0, 0, 1, 1], [], []>} : vector<8x8xf32>, vector<8x288xf32>, vector<8x288xf32> -> vector<8x288xf32>
    %18 = arith.addf %13, %17 : vector<8x288xf32>
    %19 = vector.extract_strided_slice %1 {offsets = [0, 18], sizes = [8, 288], strides = [1, 1]} : vector<8x326xf32> to vector<8x288xf32>
    %c3 = arith.constant 3 : index
    %c0_14 = arith.constant 0 : index
    %c0_15 = arith.constant 0 : index
    %20 = vector.load %arg2[%c3, %c0_14, %c0_15] : memref<9x8x8xf32, #tpu.memory_space<vmem>>, vector<1x8x8xf32>
    %21 = vector.shape_cast %20 : vector<1x8x8xf32> to vector<8x8xf32>
    %cst_16 = arith.constant dense<0.000000e+00> : vector<8x288xf32>
    %22 = tpu.matmul %21, %19, %cst_16 {dimension_numbers = #tpu.dot_dimension_numbers<[1], [0], [0], [1], [0, 0, 1, 1], [], []>} : vector<8x8xf32>, vector<8x288xf32>, vector<8x288xf32> -> vector<8x288xf32>
    %23 = arith.addf %18, %22 : vector<8x288xf32>
    %24 = vector.extract_strided_slice %1 {offsets = [0, 19], sizes = [8, 288], strides = [1, 1]} : vector<8x326xf32> to vector<8x288xf32>
    %c4 = arith.constant 4 : index
    %c0_17 = arith.constant 0 : index
    %c0_18 = arith.constant 0 : index
    %25 = vector.load %arg2[%c4, %c0_17, %c0_18] : memref<9x8x8xf32, #tpu.memory_space<vmem>>, vector<1x8x8xf32>
    %26 = vector.shape_cast %25 : vector<1x8x8xf32> to vector<8x8xf32>
    %cst_19 = arith.constant dense<0.000000e+00> : vector<8x288xf32>
    %27 = tpu.matmul %26, %24, %cst_19 {dimension_numbers = #tpu.dot_dimension_numbers<[1], [0], [0], [1], [0, 0, 1, 1], [], []>} : vector<8x8xf32>, vector<8x288xf32>, vector<8x288xf32> -> vector<8x288xf32>
    %28 = arith.addf %23, %27 : vector<8x288xf32>
    %29 = vector.extract_strided_slice %1 {offsets = [0, 20], sizes = [8, 288], strides = [1, 1]} : vector<8x326xf32> to vector<8x288xf32>
    %c5 = arith.constant 5 : index
    %c0_20 = arith.constant 0 : index
    %c0_21 = arith.constant 0 : index
    %30 = vector.load %arg2[%c5, %c0_20, %c0_21] : memref<9x8x8xf32, #tpu.memory_space<vmem>>, vector<1x8x8xf32>
    %31 = vector.shape_cast %30 : vector<1x8x8xf32> to vector<8x8xf32>
    %cst_22 = arith.constant dense<0.000000e+00> : vector<8x288xf32>
    %32 = tpu.matmul %31, %29, %cst_22 {dimension_numbers = #tpu.dot_dimension_numbers<[1], [0], [0], [1], [0, 0, 1, 1], [], []>} : vector<8x8xf32>, vector<8x288xf32>, vector<8x288xf32> -> vector<8x288xf32>
    %33 = arith.addf %28, %32 : vector<8x288xf32>
    %34 = vector.extract_strided_slice %1 {offsets = [0, 36], sizes = [8, 288], strides = [1, 1]} : vector<8x326xf32> to vector<8x288xf32>
    %c6 = arith.constant 6 : index
    %c0_23 = arith.constant 0 : index
    %c0_24 = arith.constant 0 : index
    %35 = vector.load %arg2[%c6, %c0_23, %c0_24] : memref<9x8x8xf32, #tpu.memory_space<vmem>>, vector<1x8x8xf32>
    %36 = vector.shape_cast %35 : vector<1x8x8xf32> to vector<8x8xf32>
    %cst_25 = arith.constant dense<0.000000e+00> : vector<8x288xf32>
    %37 = tpu.matmul %36, %34, %cst_25 {dimension_numbers = #tpu.dot_dimension_numbers<[1], [0], [0], [1], [0, 0, 1, 1], [], []>} : vector<8x8xf32>, vector<8x288xf32>, vector<8x288xf32> -> vector<8x288xf32>
    %38 = arith.addf %33, %37 : vector<8x288xf32>
    %39 = vector.extract_strided_slice %1 {offsets = [0, 37], sizes = [8, 288], strides = [1, 1]} : vector<8x326xf32> to vector<8x288xf32>
    %c7 = arith.constant 7 : index
    %c0_26 = arith.constant 0 : index
    %c0_27 = arith.constant 0 : index
    %40 = vector.load %arg2[%c7, %c0_26, %c0_27] : memref<9x8x8xf32, #tpu.memory_space<vmem>>, vector<1x8x8xf32>
    %41 = vector.shape_cast %40 : vector<1x8x8xf32> to vector<8x8xf32>
    %cst_28 = arith.constant dense<0.000000e+00> : vector<8x288xf32>
    %42 = tpu.matmul %41, %39, %cst_28 {dimension_numbers = #tpu.dot_dimension_numbers<[1], [0], [0], [1], [0, 0, 1, 1], [], []>} : vector<8x8xf32>, vector<8x288xf32>, vector<8x288xf32> -> vector<8x288xf32>
    %43 = arith.addf %38, %42 : vector<8x288xf32>
    %44 = vector.extract_strided_slice %1 {offsets = [0, 38], sizes = [8, 288], strides = [1, 1]} : vector<8x326xf32> to vector<8x288xf32>
    %c8 = arith.constant 8 : index
    %c0_29 = arith.constant 0 : index
    %c0_30 = arith.constant 0 : index
    %45 = vector.load %arg2[%c8, %c0_29, %c0_30] : memref<9x8x8xf32, #tpu.memory_space<vmem>>, vector<1x8x8xf32>
    %46 = vector.shape_cast %45 : vector<1x8x8xf32> to vector<8x8xf32>
    %cst_31 = arith.constant dense<0.000000e+00> : vector<8x288xf32>
    %47 = tpu.matmul %46, %44, %cst_31 {dimension_numbers = #tpu.dot_dimension_numbers<[1], [0], [0], [1], [0, 0, 1, 1], [], []>} : vector<8x8xf32>, vector<8x288xf32>, vector<8x288xf32> -> vector<8x288xf32>
    %48 = arith.addf %43, %47 : vector<8x288xf32>
    %c0_32 = arith.constant 0 : index
    %c0_33 = arith.constant 0 : index
    %49 = vector.load %arg3[%c0_32, %c0_33] : memref<8x1xf32, #tpu.memory_space<vmem>>, vector<8x1xf32>
    %50 = vector.broadcast %49 : vector<8x1xf32> to vector<8x288xf32>
    %51 = arith.addf %48, %50 : vector<8x288xf32>
    %52 = vector.broadcast %2 : vector<1x288xf32> to vector<8x288xf32>
    %53 = arith.mulf %51, %52 : vector<8x288xf32>
    %cst_34 = arith.constant dense<0.000000e+00> : vector<8xf32>
    %54 = vector.multi_reduction <add>, %53, %cst_34 [1] : vector<8x288xf32> to vector<8xf32>
    %55 = vector.shape_cast %54 : vector<8xf32> to vector<8x1xf32>
    %cst_35 = arith.constant 3.906250e-03 : f32
    %56 = vector.broadcast %cst_35 : f32 to vector<8x1xf32>
    %57 = arith.mulf %55, %56 : vector<8x1xf32>
    %58 = vector.broadcast %57 : vector<8x1xf32> to vector<8x288xf32>
    %59 = arith.subf %51, %58 : vector<8x288xf32>
    %60 = arith.mulf %59, %59 : vector<8x288xf32>
    %61 = vector.broadcast %2 : vector<1x288xf32> to vector<8x288xf32>
    %62 = arith.mulf %60, %61 : vector<8x288xf32>
    %cst_36 = arith.constant dense<0.000000e+00> : vector<8xf32>
    %63 = vector.multi_reduction <add>, %62, %cst_36 [1] : vector<8x288xf32> to vector<8xf32>
    %64 = vector.shape_cast %63 : vector<8xf32> to vector<8x1xf32>
    %cst_37 = arith.constant 3.906250e-03 : f32
    %65 = vector.broadcast %cst_37 : f32 to vector<8x1xf32>
    %66 = arith.mulf %64, %65 : vector<8x1xf32>
    %cst_38 = arith.constant 9.99999974E-6 : f32
    %67 = vector.broadcast %cst_38 : f32 to vector<8x1xf32>
    %68 = arith.addf %66, %67 : vector<8x1xf32>
    %69 = math.rsqrt %68 : vector<8x1xf32>
    %70 = vector.broadcast %69 : vector<8x1xf32> to vector<8x288xf32>
    %71 = arith.mulf %59, %70 : vector<8x288xf32>
    %c0_39 = arith.constant 0 : index
    %c0_40 = arith.constant 0 : index
    %72 = vector.load %arg4[%c0_39, %c0_40] : memref<8x1xf32, #tpu.memory_space<vmem>>, vector<8x1xf32>
    %73 = vector.broadcast %72 : vector<8x1xf32> to vector<8x288xf32>
    %74 = arith.mulf %71, %73 : vector<8x288xf32>
    %c0_41 = arith.constant 0 : index
    %c0_42 = arith.constant 0 : index
    %75 = vector.load %arg5[%c0_41, %c0_42] : memref<8x1xf32, #tpu.memory_space<vmem>>, vector<8x1xf32>
    %76 = vector.broadcast %75 : vector<8x1xf32> to vector<8x288xf32>
    %77 = arith.addf %74, %76 : vector<8x288xf32>
    %cst_43 = arith.constant 0.000000e+00 : f32
    %78 = vector.broadcast %cst_43 : f32 to vector<8x288xf32>
    %79 = arith.cmpf oge, %77, %78 : vector<8x288xf32>
    %cst_44 = arith.constant 0.00999999977 : f32
    %80 = vector.broadcast %cst_44 : f32 to vector<8x288xf32>
    %81 = arith.mulf %80, %77 : vector<8x288xf32>
    %82 = arith.select %79, %77, %81 : vector<8x288xi1>, vector<8x288xf32>
    %c0_45 = arith.constant 0 : index
    %c0_46 = arith.constant 0 : index
    %c0_47 = arith.constant 0 : index
    %83 = vector.load %arg7[%c0_45, %c0_46, %c0_47] : memref<1x8x288xf32, #tpu.memory_space<vmem>>, vector<1x8x288xf32>
    %84 = vector.shape_cast %83 : vector<1x8x288xf32> to vector<8x288xf32>
    %85 = vector.shape_cast %82 : vector<8x288xf32> to vector<1x8x288xf32>
    tpu.vector_store %arg7[%c0_45, %c0_46, %c0_47], %85 {strides = array<i32>} : memref<1x8x288xf32, #tpu.memory_space<vmem>>, vector<1x8x288xf32>,
    return
  }
  func.func @transform_0(%arg0: i32) -> (i32, i32, i32) {
    %c0_i32 = arith.constant 0 : i32
    %c0_i32_0 = arith.constant 0 : i32
    %c0_i32_1 = arith.constant 0 : i32
    return %arg0, %c0_i32, %c0_i32_0 : i32, i32, i32
  }
  func.func @transform_1(%arg0: i32) -> (i32, i32, i32) {
    %c0_i32 = arith.constant 0 : i32
    %c0_i32_0 = arith.constant 0 : i32
    %c0_i32_1 = arith.constant 0 : i32
    %c0_i32_2 = arith.constant 0 : i32
    return %c0_i32, %c0_i32_0, %c0_i32_1 : i32, i32, i32
  }
  func.func @transform_2(%arg0: i32) -> (i32, i32) {
    %c0_i32 = arith.constant 0 : i32
    %c0_i32_0 = arith.constant 0 : i32
    %c0_i32_1 = arith.constant 0 : i32
    return %c0_i32, %c0_i32_0 : i32, i32
  }
  func.func @transform_3(%arg0: i32) -> (i32, i32) {
    %c0_i32 = arith.constant 0 : i32
    %c0_i32_0 = arith.constant 0 : i32
    %c0_i32_1 = arith.constant 0 : i32
    return %c0_i32, %c0_i32_0 : i32, i32
  }
  func.func @transform_4(%arg0: i32) -> (i32, i32) {
    %c0_i32 = arith.constant 0 : i32
    %c0_i32_0 = arith.constant 0 : i32
    %c0_i32_1 = arith.constant 0 : i32
    return %c0_i32, %c0_i32_0 : i32, i32
  }
  func.func @transform_5(%arg0: i32) -> (i32, i32) {
    %c0_i32 = arith.constant 0 : i32
    %c0_i32_0 = arith.constant 0 : i32
    %c0_i32_1 = arith.constant 0 : i32
    return %c0_i32, %c0_i32_0 : i32, i32
  }
  func.func @transform_6(%arg0: i32) -> (i32, i32, i32) {
    %c0_i32 = arith.constant 0 : i32
    %c0_i32_0 = arith.constant 0 : i32
    %c0_i32_1 = arith.constant 0 : i32
    return %arg0, %c0_i32, %c0_i32_0 : i32, i32, i32
  }
}

</mosaic_0001>

<llo_original>
// kernel: tpu_custom_call.1
$region0: #{tpu_custom_call.1}
  #allocation0 [shape = 'u32[]', space=smem, size = 0x4, offset = 0x4, fixed_abs, tag = 'smem constant byte address 0x4 - core index']
  #allocation1 [shape = 'u32[144,128]{1,0:T(1,128)}', space=vmem, size = 0x12000, scoped, tag = 'internal scratch']
  %s0 = inlined_call_operand.vmem [shape: f32[2,8,326], index: 0, kind: input, shape index: {}]
  %s1 = inlined_call_operand.vmem [shape: f32[9,8,8], index: 1, kind: input, shape index: {}]
  %s2 = inlined_call_operand.vmem [shape: f32[8,1], index: 2, kind: input, shape index: {}]
  %s3 = inlined_call_operand.vmem [shape: f32[8,1], index: 3, kind: input, shape index: {}]
  %s4 = inlined_call_operand.vmem [shape: f32[8,1], index: 4, kind: input, shape index: {}]
  %s5 = inlined_call_operand.vmem [shape: f32[1,288], index: 5, kind: input, shape index: {}]
  %s6 = inlined_call_operand.hbm [shape: f32[2,8,288], index: 6, kind: output, shape index: {}]
  %s7 = sld [smem:[#allocation0]]
  $region57: #{tpu_custom_call.1} parent=0
    _
  %s9 = ssub.s32 1, %s7
  %s10 = scalar_select 0, %s9, %s7
  $region1: #{tpu_custom_call.1} parent=0
    #allocation2 [shape = 'u8[24576]{0}', space=vmem, size = 0x6000, scoped, tag = 'output window, operand 0']
    #allocation3 [shape = 's32[2]{0}', space=sflag, size = 0x8, scoped, tag = 'scoped memory for tpu_custom_call.1']
    %11 = vsyncpa [#allocation3], 0
    %s12 = scalar_lea.sflag [#allocation3], 1
    %13 = vsyncpa %s12, 0
    loop: start=0, step=1, limit=4
    $region2: #{tpu_custom_call.1} parent=1 // loop_pre_header
      _
    $region3: #{tpu_custom_call.1} parent=1 // loop_header
      %s15 = sphi 0, %s19
      %p16 = scmp.ge.s32.totalorder %s15, 4
      %s25 = sphi 0, %s27
      %s28 = sphi 0, %s25
      %s29 = sphi 0, %s28
      %s45 = sphi 0, %s29
      %s49 = sphi 0, %s49
      %s51 = sphi 0, %s49
      %s52 = sphi 0, %s51
      %s66 = sphi 0, %s52
      %s70 = sphi 0, %s70
      %s72 = sphi 0, %s70
      %s73 = sphi 0, %s72
      %s87 = sphi 0, %s73
      %s91 = sphi 0, %s91
      %s93 = sphi 0, %s91
      %s94 = sphi 0, %s93
      %s108 = sphi 0, %s94
      %s112 = sphi 0, %s112
      %s114 = sphi 0, %s112
      %s115 = sphi 0, %s114
      %s129 = sphi 0, %s115
      %s133 = sphi 0, %s133
      %s135 = sphi 0, %s133
      %s136 = sphi 0, %s135
      %s150 = sphi 0, %s136
      %s156 = sphi 0, %s158
      %s159 = sphi 0, %s156
      %s160 = sphi 0, %s159
      %s176 = sphi 0, %s160
    $region4: #{tpu_custom_call.1} parent=1 // loop_header_branch
      %18 = sbr.rel (%p16) target = $region8
    $region5: #{tpu_custom_call.1} parent=1 // loop_body
      %s20 = ssub.s32 %s15, 1
      %s21 = ssub.s32 %s15, 2
      %s22 = sadd.s32 %s15, 1
      %s23 = ssub.s32 %s15, %s22
      %p24 = scmp.eq.s32.totalorder %s23, 0
      %s26 = sadd.s32 %s25, 1
      %s27 = scalar_select %p24, %s25, %s26
      %p30 = pneg %p24
      %p31 = scmp.eq.s32.totalorder %s15, 1
      %p32 = por %p30, %p31
      %p33 = scmp.ne.s32.totalorder %s25, %s28
      %p34 = scmp.eq.s32.totalorder %s15, 0
      %p35 = por %p33, %p34
      %p36 = scmp.ne.s32.totalorder %s25, %s28
      %p37 = scmp.eq.s32.totalorder %s20, 1
      %p38 = por %p36, %p37
      %p39 = scmp.ne.s32.totalorder %s28, %s29
      %p40 = scmp.eq.s32.totalorder %s20, 0
      %p41 = por %p39, %p40
      %p42 = scmp.ne.s32.totalorder %s28, %s29
      %p43 = scmp.eq.s32.totalorder %s21, 1
      %p44 = por %p42, %p43
      %p46 = scmp.ne.s32.totalorder %s29, %s45
      %p47 = scmp.eq.s32.totalorder %s21, 0
      %p48 = por %p46, %p47
      %s50 = sadd.s32 %s49, 1
      %p53 = scmp.eq.s32.totalorder %s15, 1
      %p54 = scmp.ne.s32.totalorder %s49, %s51
      %p55 = scmp.eq.s32.totalorder %s15, 0
      %p56 = por %p54, %p55
      %p57 = scmp.ne.s32.totalorder %s49, %s51
      %p58 = scmp.eq.s32.totalorder %s20, 1
      %p59 = por %p57, %p58
      %p60 = scmp.ne.s32.totalorder %s51, %s52
      %p61 = scmp.eq.s32.totalorder %s20, 0
      %p62 = por %p60, %p61
      %p63 = scmp.ne.s32.totalorder %s51, %s52
      %p64 = scmp.eq.s32.totalorder %s21, 1
      %p65 = por %p63, %p64
      %p67 = scmp.ne.s32.totalorder %s52, %s66
      %p68 = scmp.eq.s32.totalorder %s21, 0
      %p69 = por %p67, %p68
      %s71 = sadd.s32 %s70, 1
      %p74 = scmp.eq.s32.totalorder %s15, 1
      %p75 = scmp.ne.s32.totalorder %s70, %s72
      %p76 = scmp.eq.s32.totalorder %s15, 0
      %p77 = por %p75, %p76
      %p78 = scmp.ne.s32.totalorder %s70, %s72
      %p79 = scmp.eq.s32.totalorder %s20, 1
      %p80 = por %p78, %p79
      %p81 = scmp.ne.s32.totalorder %s72, %s73
      %p82 = scmp.eq.s32.totalorder %s20, 0
      %p83 = por %p81, %p82
      %p84 = scmp.ne.s32.totalorder %s72, %s73
      %p85 = scmp.eq.s32.totalorder %s21, 1
      %p86 = por %p84, %p85
      %p88 = scmp.ne.s32.totalorder %s73, %s87
      %p89 = scmp.eq.s32.totalorder %s21, 0
      %p90 = por %p88, %p89
      %s92 = sadd.s32 %s91, 1
      %p95 = scmp.eq.s32.totalorder %s15, 1
      %p96 = scmp.ne.s32.totalorder %s91, %s93
      %p97 = scmp.eq.s32.totalorder %s15, 0
      %p98 = por %p96, %p97
      %p99 = scmp.ne.s32.totalorder %s91, %s93
      %p100 = scmp.eq.s32.totalorder %s20, 1
      %p101 = por %p99, %p100
      %p102 = scmp.ne.s32.totalorder %s93, %s94
      %p103 = scmp.eq.s32.totalorder %s20, 0
      %p104 = por %p102, %p103
      %p105 = scmp.ne.s32.totalorder %s93, %s94
      %p106 = scmp.eq.s32.totalorder %s21, 1
      %p107 = por %p105, %p106
      %p109 = scmp.ne.s32.totalorder %s94, %s108
      %p110 = scmp.eq.s32.totalorder %s21, 0
      %p111 = por %p109, %p110
      %s113 = sadd.s32 %s112, 1
      %p116 = scmp.eq.s32.totalorder %s15, 1
      %p117 = scmp.ne.s32.totalorder %s112, %s114
      %p118 = scmp.eq.s32.totalorder %s15, 0
      %p119 = por %p117, %p118
      %p120 = scmp.ne.s32.totalorder %s112, %s114
      %p121 = scmp.eq.s32.totalorder %s20, 1
      %p122 = por %p120, %p121
      %p123 = scmp.ne.s32.totalorder %s114, %s115
      %p124 = scmp.eq.s32.totalorder %s20, 0
      %p125 = por %p123, %p124
      %p126 = scmp.ne.s32.totalorder %s114, %s115
      %p127 = scmp.eq.s32.totalorder %s21, 1
      %p128 = por %p126, %p127
      %p130 = scmp.ne.s32.totalorder %s115, %s129
      %p131 = scmp.eq.s32.totalorder %s21, 0
      %p132 = por %p130, %p131
      %s134 = sadd.s32 %s133, 1
      %p137 = scmp.eq.s32.totalorder %s15, 1
      %p138 = scmp.ne.s32.totalorder %s133, %s135
      %p139 = scmp.eq.s32.totalorder %s15, 0
      %p140 = por %p138, %p139
      %p141 = scmp.ne.s32.totalorder %s133, %s135
      %p142 = scmp.eq.s32.totalorder %s20, 1
      %p143 = por %p141, %p142
      %p144 = scmp.ne.s32.totalorder %s135, %s136
      %p145 = scmp.eq.s32.totalorder %s20, 0
      %p146 = por %p144, %p145
      %p147 = scmp.ne.s32.totalorder %s135, %s136
      %p148 = scmp.eq.s32.totalorder %s21, 1
      %p149 = por %p147, %p148
      %p151 = scmp.ne.s32.totalorder %s136, %s150
      %p152 = scmp.eq.s32.totalorder %s21, 0
      %p153 = por %p151, %p152
      %s154 = ssub.s32 %s15, %s22
      %p155 = scmp.eq.s32.totalorder %s154, 0
      %s157 = sadd.s32 %s156, 1
      %s158 = scalar_select %p155, %s156, %s157
      %p161 = pneg %p155
      %p162 = scmp.eq.s32.totalorder %s15, 1
      %p163 = por %p161, %p162
      %p164 = scmp.ne.s32.totalorder %s156, %s159
      %p165 = scmp.eq.s32.totalorder %s15, 0
      %p166 = por %p164, %p165
      %p167 = scmp.ne.s32.totalorder %s156, %s159
      %p168 = scmp.eq.s32.totalorder %s20, 1
      %p169 = por %p167, %p168
      %p170 = scmp.ne.s32.totalorder %s159, %s160
      %p171 = scmp.eq.s32.totalorder %s20, 0
      %p172 = por %p170, %p171
      %p173 = scmp.ne.s32.totalorder %s159, %s160
      %p174 = scmp.eq.s32.totalorder %s21, 1
      %p175 = por %p173, %p174
      %p177 = scmp.ne.s32.totalorder %s160, %s176
      %p178 = scmp.eq.s32.totalorder %s21, 0
      %p179 = por %p177, %p178
      %p180 = scmp.le.s32.totalorder 1, %s15
      %p181 = scmp.lt.s32.totalorder %s15, 3
      %p182 = pnand %p180, %p181
      %p183 = pneg %p182
      // Predicated region
      $region9: #{tpu_custom_call.1} parent=5 // pred_check
        _
      $region10: #{tpu_custom_call.1} parent=5 // pred_check_branch
        %185 = sbr.rel (%p182) target = $region12
      $region11: #{tpu_custom_call.1} parent=5 // pred_region
        %s186 = ssub.s32 %s15, 1
        // Predicated region
        $region13: #{tpu_custom_call.1} parent=11 // pred_check
          %p187 = pneg %p62
        $region14: #{tpu_custom_call.1} parent=11 // pred_check_branch
          %189 = sbr.rel (%p187) target = $region16
        $region15: #{tpu_custom_call.1} parent=11 // pred_region
          _
        $region16: #{tpu_custom_call.1} parent=11 // pred_fallthru
          _
        // Predicated region
        $region17: #{tpu_custom_call.1} parent=11 // pred_check
          %p190 = pneg %p83
        $region18: #{tpu_custom_call.1} parent=11 // pred_check_branch
          %192 = sbr.rel (%p190) target = $region20
        $region19: #{tpu_custom_call.1} parent=11 // pred_region
          _
        $region20: #{tpu_custom_call.1} parent=11 // pred_fallthru
          _
        // Predicated region
        $region21: #{tpu_custom_call.1} parent=11 // pred_check
          %p193 = pneg %p104
        $region22: #{tpu_custom_call.1} parent=11 // pred_check_branch
          %195 = sbr.rel (%p193) target = $region24
        $region23: #{tpu_custom_call.1} parent=11 // pred_region
          _
        $region24: #{tpu_custom_call.1} parent=11 // pred_fallthru
          _
        // Predicated region
        $region25: #{tpu_custom_call.1} parent=11 // pred_check
          %p196 = pneg %p125
        $region26: #{tpu_custom_call.1} parent=11 // pred_check_branch
          %198 = sbr.rel (%p196) target = $region28
        $region27: #{tpu_custom_call.1} parent=11 // pred_region
          _
        $region28: #{tpu_custom_call.1} parent=11 // pred_fallthru
          _
        // Predicated region
        $region29: #{tpu_custom_call.1} parent=11 // pred_check
          %p199 = pneg %p146
        $region30: #{tpu_custom_call.1} parent=11 // pred_check_branch
          %201 = sbr.rel (%p199) target = $region32
        $region31: #{tpu_custom_call.1} parent=11 // pred_region
          _
        $region32: #{tpu_custom_call.1} parent=11 // pred_fallthru
          _
      $region12: #{tpu_custom_call.1} parent=5 // pred_fallthru
        _
      %p202 = scmp.lt.s32.totalorder %s15, 2
      // Predicated region
      $region33: #{tpu_custom_call.1} parent=5 // pred_check
        %p203 = pneg %p202
      $region34: #{tpu_custom_call.1} parent=5 // pred_check_branch
        %205 = sbr.rel (%p203) target = $region36
      $region35: #{tpu_custom_call.1} parent=5 // pred_region
        // Predicated region
        $region37: #{tpu_custom_call.1} parent=35 // pred_check
          %p206 = pneg %p35
        $region38: #{tpu_custom_call.1} parent=35 // pred_check_branch
          %208 = sbr.rel (%p206) target = $region40
        $region39: #{tpu_custom_call.1} parent=35 // pred_region
          %p209 = scmp.lt.s32.totalorder %s15, 1
          %s210 = scalar_select %p209, %s15, 1
          %s211 = smul.addr %s210, 3
          %s212 = smul.addr %s211, 8
          %s213 = scalar_lea.vmem %s0, %s212
        $region40: #{tpu_custom_call.1} parent=35 // pred_fallthru
          _
      $region36: #{tpu_custom_call.1} parent=5 // pred_fallthru
        _
      %p214 = scmp.le.s32.totalorder 1, %s15
      %p215 = scmp.lt.s32.totalorder %s15, 3
      %p216 = pnand %p214, %p215
      %p217 = pneg %p216
      // Predicated region
      $region41: #{tpu_custom_call.1} parent=5 // pred_check
        _
      $region42: #{tpu_custom_call.1} parent=5 // pred_check_branch
        %219 = sbr.rel (%p216) target = $region44
      $region43: #{tpu_custom_call.1} parent=5 // pred_region
        %s220 = ssub.s32 %s15, 1
        %p221 = scmp.lt.s32.totalorder %s20, 1
        %s222 = scalar_select %p221, %s20, 1
        %s223 = smul.addr %s222, 3
        %s224 = smul.addr %s223, 8
        %s225 = scalar_lea.vmem %s0, %s224
        %p226 = pneg %p41
        %p227 = pneg %p38
        %p228 = pneg %p62
        %p229 = pneg %p59
        %p230 = pneg %p83
        %p231 = pneg %p80
        %p232 = pneg %p104
        %p233 = pneg %p101
        %p234 = pneg %p125
        %p235 = pneg %p122
        %p236 = pneg %p146
        %p237 = pneg %p143
        %p238 = pneg %p172
        %p239 = pneg %p169
        %s240 = sand.u32 %s159, 1
        %s241 = scalar_lea.sflag [#allocation3], %s240
        %s242 = sand.u32 %s159, 1
        %s243 = smul.addr %s242, 24
        %s244 = scalar_lea.vmem [#allocation2], %s243
        %p245 = scmp.lt.s32.totalorder %s20, 1
        %s246 = scalar_select %p245, %s20, 1
        %s247 = smul.addr %s246, 3
        %s248 = smul.addr %s247, 8
        %s249 = scalar_lea.vmem %s0, %s248
        %v250 = vld [vmem:[%s249] sm:$0xff]
        %v251 = vld [vmem:[%s249 + $0x8] sm:$0xff]
        %v252 = vld [vmem:[%s249 + $0x10] sm:$0xff]
        %v253 = vld [vmem:[%s5] sm:$0x7]
        %v254 = vld [vmem:[%s1] sm:$0xff]
        %s255 = scalar_lea.vmem %s1, 8
        %v256 = vld [vmem:[%s255] sm:$0xff]
        %260 = vrot.lane.b32.xlu0 %v250, 127
        %v261 = vpop.permute.xlu0 %260
        %262 = vrot.lane.b32.xlu0 %v251, 127
        %v263 = vpop.permute.xlu0 %262
        %264 = vrot.lane.b32.xlu0 %v252, 127
        %v265 = vpop.permute.xlu0 %264
        %vm266 = vcmask 1039360
        %v267 = vsel %vm266, %v261, %v263
        %v268 = vsel %vm266, %v263, %v265
        %vm272 = vcmask 64512
        %v274 = vsel %vm272, %v256, 0
        %276 = vmatprep.subr.mxu0 %v268
        %277 = vmatpush1.msra.mxu0 %v267
        %278 = vmatprep.subr.mxu0 0.0
        %279 = vmatpush1.msra.mxu0 0.0
        %280 = vmatprep.subr.mxu0 0.0
        %281 = vmatpush1.msra.mxu0 0.0
        %282 = vmatprep.subr.mxu0 0.0
        %283 = vmatpush1.msra.mxu0 0.0
        %284 = vmatprep.subr.mxu0 0.0
        %285 = vmatpush1.msra.mxu0 0.0
        %286 = vmatprep.subr.mxu0 0.0
        %287 = vmatpush1.msra.mxu0 0.0
        %288 = vmatprep.subr.mxu0 0.0
        %289 = vmatpush1.msra.mxu0 0.0
        %290 = vmatprep.subr.mxu0 0.0
        %291 = vmatpush1.msra.mxu0 0.0
        %292 = vmatprep.subr.mxu0 0.0
        %293 = vmatpush1.msra.mxu0 0.0
        %294 = vmatprep.subr.mxu0 0.0
        %295 = vmatpush1.msra.mxu0 0.0
        %296 = vmatprep.subr.mxu0 0.0
        %297 = vmatpush1.msra.mxu0 0.0
        %298 = vmatprep.subr.mxu0 0.0
        %299 = vmatpush1.msra.mxu0 0.0
        %300 = vmatprep.subr.mxu0 0.0
        %301 = vmatpush1.msra.mxu0 0.0
        %302 = vmatprep.subr.mxu0 0.0
        %303 = vmatpush1.msra.mxu0 0.0
        %304 = vmatprep.subr.mxu0 0.0
        %305 = vmatpush1.msra.mxu0 0.0
        %306 = vmatprep.subr.mxu0 0.0
        %307 = vmatpush1.msra.mxu0 0.0
        %308 = vmatprep.subr.mxu0 0.0
        %309 = vmatpush1.msra.mxu0 0.0
        %310 = vmatprep.subr.mxu0 0.0
        %311 = vmatpush1.msra.mxu0 0.0
        %312 = vmatprep.subr.mxu0 0.0
        %313 = vmatpush1.msra.mxu0 0.0
        %314 = vmatprep.subr.mxu0 0.0
        %315 = vmatpush1.msra.mxu0 0.0
        %316 = vmatprep.subr.mxu0 0.0
        %317 = vmatpush1.msra.mxu0 0.0
        %318 = vmatprep.subr.mxu0 0.0
        %319 = vmatpush1.msra.mxu0 0.0
        %320 = vmatprep.subr.mxu0 0.0
        %321 = vmatpush1.msra.mxu0 0.0
        %322 = vmatprep.subr.mxu0 0.0
        %323 = vmatpush1.msra.mxu0 0.0
        %324 = vmatprep.subr.mxu0 0.0
        %325 = vmatpush1.msra.mxu0 0.0
        %326 = vmatprep.subr.mxu0 0.0
        %327 = vmatpush1.msra.mxu0 0.0
        %328 = vmatprep.subr.mxu0 0.0
        %329 = vmatpush1.msra.mxu0 0.0
        %330 = vmatprep.subr.mxu0 0.0
        %331 = vmatpush1.msra.mxu0 0.0
        %332 = vmatprep.subr.mxu0 0.0
        %333 = vmatpush1.msra.mxu0 0.0
        %334 = vmatprep.subr.mxu0 0.0
        %335 = vmatpush1.msra.mxu0 0.0
        %336 = vmatprep.subr.mxu0 0.0
        %337 = vmatpush1.msra.mxu0 0.0
        %338 = vmatprep.subr.mxu0 0.0
        %339 = vmatpush1.msra.mxu0 0.0
        %340 = vmatprep.mubr.f32.mxu0 0.0
        %341 = vmatmul.mubr.f32.gmra.mrb[0].mxu0 %v274
        %v342 = vpop.f32.mrb[0].mxu0
        %v343 = vadd.f32 0.0, %v342
        %v344 = vpop.f32.mrb[0].mxu0
        %v345 = vadd.f32 0.0, %v344
        %346 = vdwg.mxu0
        %347 = vmatprep.subr.mxu0 0.0
        %348 = vmatpush1.msra.mxu0 %v265
        %349 = vmatprep.subr.mxu0 0.0
        %350 = vmatpush1.msra.mxu0 0.0
        %351 = vmatprep.subr.mxu0 0.0
        %352 = vmatpush1.msra.mxu0 0.0
        %353 = vmatprep.subr.mxu0 0.0
        %354 = vmatpush1.msra.mxu0 0.0
        %355 = vmatprep.subr.mxu0 0.0
        %356 = vmatpush1.msra.mxu0 0.0
        %357 = vmatprep.subr.mxu0 0.0
        %358 = vmatpush1.msra.mxu0 0.0
        %359 = vmatprep.subr.mxu0 0.0
        %360 = vmatpush1.msra.mxu0 0.0
        %361 = vmatprep.subr.mxu0 0.0
        %362 = vmatpush1.msra.mxu0 0.0
        %363 = vmatprep.subr.mxu0 0.0
        %364 = vmatpush1.msra.mxu0 0.0
        %365 = vmatprep.subr.mxu0 0.0
        %366 = vmatpush1.msra.mxu0 0.0
        %367 = vmatprep.subr.mxu0 0.0
        %368 = vmatpush1.msra.mxu0 0.0
        %369 = vmatprep.subr.mxu0 0.0
        %370 = vmatpush1.msra.mxu0 0.0
        %371 = vmatprep.subr.mxu0 0.0
        %372 = vmatpush1.msra.mxu0 0.0
        %373 = vmatprep.subr.mxu0 0.0
        %374 = vmatpush1.msra.mxu0 0.0
        %375 = vmatprep.subr.mxu0 0.0
        %376 = vmatpush1.msra.mxu0 0.0
        %377 = vmatprep.subr.mxu0 0.0
        %378 = vmatpush1.msra.mxu0 0.0
        %379 = vmatprep.subr.mxu0 0.0
        %380 = vmatpush1.msra.mxu0 0.0
        %381 = vmatprep.subr.mxu0 0.0
        %382 = vmatpush1.msra.mxu0 0.0
        %383 = vmatprep.subr.mxu0 0.0
        %384 = vmatpush1.msra.mxu0 0.0
        %385 = vmatprep.subr.mxu0 0.0
        %386 = vmatpush1.msra.mxu0 0.0
        %387 = vmatprep.subr.mxu0 0.0
        %388 = vmatpush1.msra.mxu0 0.0
        %389 = vmatprep.subr.mxu0 0.0
        %390 = vmatpush1.msra.mxu0 0.0
        %391 = vmatprep.subr.mxu0 0.0
        %392 = vmatpush1.msra.mxu0 0.0
        %393 = vmatprep.subr.mxu0 0.0
        %394 = vmatpush1.msra.mxu0 0.0
        %395 = vmatprep.subr.mxu0 0.0
        %396 = vmatpush1.msra.mxu0 0.0
        %397 = vmatprep.subr.mxu0 0.0
        %398 = vmatpush1.msra.mxu0 0.0
        %399 = vmatprep.subr.mxu0 0.0
        %400 = vmatpush1.msra.mxu0 0.0
        %401 = vmatprep.subr.mxu0 0.0
        %402 = vmatpush1.msra.mxu0 0.0
        %403 = vmatprep.subr.mxu0 0.0
        %404 = vmatpush1.msra.mxu0 0.0
        %405 = vmatprep.subr.mxu0 0.0
        %406 = vmatpush1.msra.mxu0 0.0
        %407 = vmatprep.subr.mxu0 0.0
        %408 = vmatpush1.msra.mxu0 0.0
        %409 = vmatprep.subr.mxu0 0.0
        %410 = vmatpush1.msra.mxu0 0.0
        %411 = vmatprep.mubr.f32.mxu0 0.0
        %412 = vmatmul.mubr.f32.gmra.mrb[0].mxu0 %v274
        %v413 = vpop.f32.mrb[0].mxu0
        %v414 = vadd.f32 0.0, %v413
        %v415 = vpop.f32.mrb[0].mxu0
        %416 = vdwg.mxu0
        %v418 = vsel %vm272, %v254, 0
        %420 = vmatprep.subr.mxu0 %v251
        %421 = vmatpush1.msra.mxu0 %v250
        %422 = vmatprep.subr.mxu0 0.0
        %423 = vmatpush1.msra.mxu0 0.0
        %424 = vmatprep.subr.mxu0 0.0
        %425 = vmatpush1.msra.mxu0 0.0
        %426 = vmatprep.subr.mxu0 0.0
        %427 = vmatpush1.msra.mxu0 0.0
        %428 = vmatprep.subr.mxu0 0.0
        %429 = vmatpush1.msra.mxu0 0.0
        %430 = vmatprep.subr.mxu0 0.0
        %431 = vmatpush1.msra.mxu0 0.0
        %432 = vmatprep.subr.mxu0 0.0
        %433 = vmatpush1.msra.mxu0 0.0
        %434 = vmatprep.subr.mxu0 0.0
        %435 = vmatpush1.msra.mxu0 0.0
        %436 = vmatprep.subr.mxu0 0.0
        %437 = vmatpush1.msra.mxu0 0.0
        %438 = vmatprep.subr.mxu0 0.0
        %439 = vmatpush1.msra.mxu0 0.0
        %440 = vmatprep.subr.mxu0 0.0
        %441 = vmatpush1.msra.mxu0 0.0
        %442 = vmatprep.subr.mxu0 0.0
        %443 = vmatpush1.msra.mxu0 0.0
        %444 = vmatprep.subr.mxu0 0.0
        %445 = vmatpush1.msra.mxu0 0.0
        %446 = vmatprep.subr.mxu0 0.0
        %447 = vmatpush1.msra.mxu0 0.0
        %448 = vmatprep.subr.mxu0 0.0
        %449 = vmatpush1.msra.mxu0 0.0
        %450 = vmatprep.subr.mxu0 0.0
        %451 = vmatpush1.msra.mxu0 0.0
        %452 = vmatprep.subr.mxu0 0.0
        %453 = vmatpush1.msra.mxu0 0.0
        %454 = vmatprep.subr.mxu0 0.0
        %455 = vmatpush1.msra.mxu0 0.0
        %456 = vmatprep.subr.mxu0 0.0
        %457 = vmatpush1.msra.mxu0 0.0
        %458 = vmatprep.subr.mxu0 0.0
        %459 = vmatpush1.msra.mxu0 0.0
        %460 = vmatprep.subr.mxu0 0.0
        %461 = vmatpush1.msra.mxu0 0.0
        %462 = vmatprep.subr.mxu0 0.0
        %463 = vmatpush1.msra.mxu0 0.0
        %464 = vmatprep.subr.mxu0 0.0
        %465 = vmatpush1.msra.mxu0 0.0
        %466 = vmatprep.subr.mxu0 0.0
        %467 = vmatpush1.msra.mxu0 0.0
        %468 = vmatprep.subr.mxu0 0.0
        %469 = vmatpush1.msra.mxu0 0.0
        %470 = vmatprep.subr.mxu0 0.0
        %471 = vmatpush1.msra.mxu0 0.0
        %472 = vmatprep.subr.mxu0 0.0
        %473 = vmatpush1.msra.mxu0 0.0
        %474 = vmatprep.subr.mxu0 0.0
        %475 = vmatpush1.msra.mxu0 0.0
        %476 = vmatprep.subr.mxu0 0.0
        %477 = vmatpush1.msra.mxu0 0.0
        %478 = vmatprep.subr.mxu0 0.0
        %479 = vmatpush1.msra.mxu0 0.0
        %480 = vmatprep.subr.mxu0 0.0
        %481 = vmatpush1.msra.mxu0 0.0
        %482 = vmatprep.subr.mxu0 0.0
        %483 = vmatpush1.msra.mxu0 0.0
        %484 = vmatprep.mubr.f32.mxu0 0.0
        %485 = vmatmul.mubr.f32.gmra.mrb[0].mxu0 %v418
        %v486 = vpop.f32.mrb[0].mxu0
        %v487 = vadd.f32 %v343, %v486
        %v488 = vpop.f32.mrb[0].mxu0
        %v489 = vadd.f32 %v345, %v488
        %490 = vdwg.mxu0
        %491 = vmatprep.subr.mxu0 0.0
        %492 = vmatpush1.msra.mxu0 %v252
        %493 = vmatprep.subr.mxu0 0.0
        %494 = vmatpush1.msra.mxu0 0.0
        %495 = vmatprep.subr.mxu0 0.0
        %496 = vmatpush1.msra.mxu0 0.0
        %497 = vmatprep.subr.mxu0 0.0
        %498 = vmatpush1.msra.mxu0 0.0
        %499 = vmatprep.subr.mxu0 0.0
        %500 = vmatpush1.msra.mxu0 0.0
        %501 = vmatprep.subr.mxu0 0.0
        %502 = vmatpush1.msra.mxu0 0.0
        %503 = vmatprep.subr.mxu0 0.0
        %504 = vmatpush1.msra.mxu0 0.0
        %505 = vmatprep.subr.mxu0 0.0
        %506 = vmatpush1.msra.mxu0 0.0
        %507 = vmatprep.subr.mxu0 0.0
        %508 = vmatpush1.msra.mxu0 0.0
        %509 = vmatprep.subr.mxu0 0.0
        %510 = vmatpush1.msra.mxu0 0.0
        %511 = vmatprep.subr.mxu0 0.0
        %512 = vmatpush1.msra.mxu0 0.0
        %513 = vmatprep.subr.mxu0 0.0
        %514 = vmatpush1.msra.mxu0 0.0
        %515 = vmatprep.subr.mxu0 0.0
        %516 = vmatpush1.msra.mxu0 0.0
        %517 = vmatprep.subr.mxu0 0.0
        %518 = vmatpush1.msra.mxu0 0.0
        %519 = vmatprep.subr.mxu0 0.0
        %520 = vmatpush1.msra.mxu0 0.0
        %521 = vmatprep.subr.mxu0 0.0
        %522 = vmatpush1.msra.mxu0 0.0
        %523 = vmatprep.subr.mxu0 0.0
        %524 = vmatpush1.msra.mxu0 0.0
        %525 = vmatprep.subr.mxu0 0.0
        %526 = vmatpush1.msra.mxu0 0.0
        %527 = vmatprep.subr.mxu0 0.0
        %528 = vmatpush1.msra.mxu0 0.0
        %529 = vmatprep.subr.mxu0 0.0
        %530 = vmatpush1.msra.mxu0 0.0
        %531 = vmatprep.subr.mxu0 0.0
        %532 = vmatpush1.msra.mxu0 0.0
        %533 = vmatprep.subr.mxu0 0.0
        %534 = vmatpush1.msra.mxu0 0.0
        %535 = vmatprep.subr.mxu0 0.0
        %536 = vmatpush1.msra.mxu0 0.0
        %537 = vmatprep.subr.mxu0 0.0
        %538 = vmatpush1.msra.mxu0 0.0
        %539 = vmatprep.subr.mxu0 0.0
        %540 = vmatpush1.msra.mxu0 0.0
        %541 = vmatprep.subr.mxu0 0.0
        %542 = vmatpush1.msra.mxu0 0.0
        %543 = vmatprep.subr.mxu0 0.0
        %544 = vmatpush1.msra.mxu0 0.0
        %545 = vmatprep.subr.mxu0 0.0
        %546 = vmatpush1.msra.mxu0 0.0
        %547 = vmatprep.subr.mxu0 0.0
        %548 = vmatpush1.msra.mxu0 0.0
        %549 = vmatprep.subr.mxu0 0.0
        %550 = vmatpush1.msra.mxu0 0.0
        %551 = vmatprep.subr.mxu0 0.0
        %552 = vmatpush1.msra.mxu0 0.0
        %553 = vmatprep.subr.mxu0 0.0
        %554 = vmatpush1.msra.mxu0 0.0
        %555 = vmatprep.mubr.f32.mxu0 0.0
        %556 = vmatmul.mubr.f32.gmra.mrb[0].mxu0 %v418
        %v557 = vpop.f32.mrb[0].mxu0
        %v558 = vadd.f32 %v414, %v557
        %v559 = vpop.f32.mrb[0].mxu0
        %560 = vdwg.mxu0
        %s561 = scalar_lea.vmem %s1, 16
        %v562 = vld [vmem:[%s561] sm:$0xff]
        %563 = vrot.lane.b32.xlu0 %v250, 126
        %v564 = vpop.permute.xlu0 %563
        %565 = vrot.lane.b32.xlu0 %v251, 126
        %v566 = vpop.permute.xlu0 %565
        %567 = vrot.lane.b32.xlu0 %v252, 126
        %v568 = vpop.permute.xlu0 %567
        %vm569 = vcmask 1031168
        %v570 = vsel %vm569, %v564, %v566
        %v571 = vsel %vm569, %v566, %v568
        %v576 = vsel %vm272, %v562, 0
        %578 = vmatprep.subr.mxu0 %v571
        %579 = vmatpush1.msra.mxu0 %v570
        %580 = vmatprep.subr.mxu0 0.0
        %581 = vmatpush1.msra.mxu0 0.0
        %582 = vmatprep.subr.mxu0 0.0
        %583 = vmatpush1.msra.mxu0 0.0
        %584 = vmatprep.subr.mxu0 0.0
        %585 = vmatpush1.msra.mxu0 0.0
        %586 = vmatprep.subr.mxu0 0.0
        %587 = vmatpush1.msra.mxu0 0.0
        %588 = vmatprep.subr.mxu0 0.0
        %589 = vmatpush1.msra.mxu0 0.0
        %590 = vmatprep.subr.mxu0 0.0
        %591 = vmatpush1.msra.mxu0 0.0
        %592 = vmatprep.subr.mxu0 0.0
        %593 = vmatpush1.msra.mxu0 0.0
        %594 = vmatprep.subr.mxu0 0.0
        %595 = vmatpush1.msra.mxu0 0.0
        %596 = vmatprep.subr.mxu0 0.0
        %597 = vmatpush1.msra.mxu0 0.0
        %598 = vmatprep.subr.mxu0 0.0
        %599 = vmatpush1.msra.mxu0 0.0
        %600 = vmatprep.subr.mxu0 0.0
        %601 = vmatpush1.msra.mxu0 0.0
        %602 = vmatprep.subr.mxu0 0.0
        %603 = vmatpush1.msra.mxu0 0.0
        %604 = vmatprep.subr.mxu0 0.0
        %605 = vmatpush1.msra.mxu0 0.0
        %606 = vmatprep.subr.mxu0 0.0
        %607 = vmatpush1.msra.mxu0 0.0
        %608 = vmatprep.subr.mxu0 0.0
        %609 = vmatpush1.msra.mxu0 0.0
        %610 = vmatprep.subr.mxu0 0.0
        %611 = vmatpush1.msra.mxu0 0.0
        %612 = vmatprep.subr.mxu0 0.0
        %613 = vmatpush1.msra.mxu0 0.0
        %614 = vmatprep.subr.mxu0 0.0
        %615 = vmatpush1.msra.mxu0 0.0
        %616 = vmatprep.subr.mxu0 0.0
        %617 = vmatpush1.msra.mxu0 0.0
        %618 = vmatprep.subr.mxu0 0.0
        %619 = vmatpush1.msra.mxu0 0.0
        %620 = vmatprep.subr.mxu0 0.0
        %621 = vmatpush1.msra.mxu0 0.0
        %622 = vmatprep.subr.mxu0 0.0
        %623 = vmatpush1.msra.mxu0 0.0
        %624 = vmatprep.subr.mxu0 0.0
        %625 = vmatpush1.msra.mxu0 0.0
        %626 = vmatprep.subr.mxu0 0.0
        %627 = vmatpush1.msra.mxu0 0.0
        %628 = vmatprep.subr.mxu0 0.0
        %629 = vmatpush1.msra.mxu0 0.0
        %630 = vmatprep.subr.mxu0 0.0
        %631 = vmatpush1.msra.mxu0 0.0
        %632 = vmatprep.subr.mxu0 0.0
        %633 = vmatpush1.msra.mxu0 0.0
        %634 = vmatprep.subr.mxu0 0.0
        %635 = vmatpush1.msra.mxu0 0.0
        %636 = vmatprep.subr.mxu0 0.0
        %637 = vmatpush1.msra.mxu0 0.0
        %638 = vmatprep.subr.mxu0 0.0
        %639 = vmatpush1.msra.mxu0 0.0
        %640 = vmatprep.subr.mxu0 0.0
        %641 = vmatpush1.msra.mxu0 0.0
        %642 = vmatprep.mubr.f32.mxu0 0.0
        %643 = vmatmul.mubr.f32.gmra.mrb[0].mxu0 %v576
        %v644 = vpop.f32.mrb[0].mxu0
        %v645 = vadd.f32 0.0, %v644
        %v646 = vpop.f32.mrb[0].mxu0
        %v647 = vadd.f32 0.0, %v646
        %648 = vdwg.mxu0
        %649 = vmatprep.subr.mxu0 0.0
        %650 = vmatpush1.msra.mxu0 %v568
        %651 = vmatprep.subr.mxu0 0.0
        %652 = vmatpush1.msra.mxu0 0.0
        %653 = vmatprep.subr.mxu0 0.0
        %654 = vmatpush1.msra.mxu0 0.0
        %655 = vmatprep.subr.mxu0 0.0
        %656 = vmatpush1.msra.mxu0 0.0
        %657 = vmatprep.subr.mxu0 0.0
        %658 = vmatpush1.msra.mxu0 0.0
        %659 = vmatprep.subr.mxu0 0.0
        %660 = vmatpush1.msra.mxu0 0.0
        %661 = vmatprep.subr.mxu0 0.0
        %662 = vmatpush1.msra.mxu0 0.0
        %663 = vmatprep.subr.mxu0 0.0
        %664 = vmatpush1.msra.mxu0 0.0
        %665 = vmatprep.subr.mxu0 0.0
        %666 = vmatpush1.msra.mxu0 0.0
        %667 = vmatprep.subr.mxu0 0.0
        %668 = vmatpush1.msra.mxu0 0.0
        %669 = vmatprep.subr.mxu0 0.0
        %670 = vmatpush1.msra.mxu0 0.0
        %671 = vmatprep.subr.mxu0 0.0
        %672 = vmatpush1.msra.mxu0 0.0
        %673 = vmatprep.subr.mxu0 0.0
        %674 = vmatpush1.msra.mxu0 0.0
        %675 = vmatprep.subr.mxu0 0.0
        %676 = vmatpush1.msra.mxu0 0.0
        %677 = vmatprep.subr.mxu0 0.0
        %678 = vmatpush1.msra.mxu0 0.0
        %679 = vmatprep.subr.mxu0 0.0
        %680 = vmatpush1.msra.mxu0 0.0
        %681 = vmatprep.subr.mxu0 0.0
        %682 = vmatpush1.msra.mxu0 0.0
        %683 = vmatprep.subr.mxu0 0.0
        %684 = vmatpush1.msra.mxu0 0.0
        %685 = vmatprep.subr.mxu0 0.0
        %686 = vmatpush1.msra.mxu0 0.0
        %687 = vmatprep.subr.mxu0 0.0
        %688 = vmatpush1.msra.mxu0 0.0
        %689 = vmatprep.subr.mxu0 0.0
        %690 = vmatpush1.msra.mxu0 0.0
        %691 = vmatprep.subr.mxu0 0.0
        %692 = vmatpush1.msra.mxu0 0.0
        %693 = vmatprep.subr.mxu0 0.0
        %694 = vmatpush1.msra.mxu0 0.0
        %695 = vmatprep.subr.mxu0 0.0
        %696 = vmatpush1.msra.mxu0 0.0
        %697 = vmatprep.subr.mxu0 0.0
        %698 = vmatpush1.msra.mxu0 0.0
        %699 = vmatprep.subr.mxu0 0.0
        %700 = vmatpush1.msra.mxu0 0.0
        %701 = vmatprep.subr.mxu0 0.0
        %702 = vmatpush1.msra.mxu0 0.0
        %703 = vmatprep.subr.mxu0 0.0
        %704 = vmatpush1.msra.mxu0 0.0
        %705 = vmatprep.subr.mxu0 0.0
        %706 = vmatpush1.msra.mxu0 0.0
        %707 = vmatprep.subr.mxu0 0.0
        %708 = vmatpush1.msra.mxu0 0.0
        %709 = vmatprep.subr.mxu0 0.0
        %710 = vmatpush1.msra.mxu0 0.0
        %711 = vmatprep.subr.mxu0 0.0
        %712 = vmatpush1.msra.mxu0 0.0
        %713 = vmatprep.mubr.f32.mxu0 0.0
        %714 = vmatmul.mubr.f32.gmra.mrb[0].mxu0 %v576
        %v715 = vpop.f32.mrb[0].mxu0
        %v716 = vadd.f32 0.0, %v715
        %v717 = vpop.f32.mrb[0].mxu0
        %718 = vdwg.mxu0
        %v719 = vadd.f32 %v487, %v645
        %v720 = vadd.f32 %v489, %v647
        %v721 = vadd.f32 %v558, %v716
        %s722 = scalar_lea.vmem %s1, 24
        %v723 = vld [vmem:[%s722] sm:$0xff]
        %724 = vrot.lane.b32.xlu0 %v250, 110
        %v725 = vpop.permute.xlu0 %724
        %726 = vrot.lane.b32.xlu0 %v251, 110
        %v727 = vpop.permute.xlu0 %726
        %728 = vrot.lane.b32.xlu0 %v252, 110
        %v729 = vpop.permute.xlu0 %728
        %vm730 = vcmask 900096
        %v731 = vsel %vm730, %v725, %v727
        %v732 = vsel %vm730, %v727, %v729
        %v737 = vsel %vm272, %v723, 0
        %739 = vmatprep.subr.mxu0 %v732
        %740 = vmatpush1.msra.mxu0 %v731
        %741 = vmatprep.subr.mxu0 0.0
        %742 = vmatpush1.msra.mxu0 0.0
        %743 = vmatprep.subr.mxu0 0.0
        %744 = vmatpush1.msra.mxu0 0.0
        %745 = vmatprep.subr.mxu0 0.0
        %746 = vmatpush1.msra.mxu0 0.0
        %747 = vmatprep.subr.mxu0 0.0
        %748 = vmatpush1.msra.mxu0 0.0
        %749 = vmatprep.subr.mxu0 0.0
        %750 = vmatpush1.msra.mxu0 0.0
        %751 = vmatprep.subr.mxu0 0.0
        %752 = vmatpush1.msra.mxu0 0.0
        %753 = vmatprep.subr.mxu0 0.0
        %754 = vmatpush1.msra.mxu0 0.0
        %755 = vmatprep.subr.mxu0 0.0
        %756 = vmatpush1.msra.mxu0 0.0
        %757 = vmatprep.subr.mxu0 0.0
        %758 = vmatpush1.msra.mxu0 0.0
        %759 = vmatprep.subr.mxu0 0.0
        %760 = vmatpush1.msra.mxu0 0.0
        %761 = vmatprep.subr.mxu0 0.0
        %762 = vmatpush1.msra.mxu0 0.0
        %763 = vmatprep.subr.mxu0 0.0
        %764 = vmatpush1.msra.mxu0 0.0
        %765 = vmatprep.subr.mxu0 0.0
        %766 = vmatpush1.msra.mxu0 0.0
        %767 = vmatprep.subr.mxu0 0.0
        %768 = vmatpush1.msra.mxu0 0.0
        %769 = vmatprep.subr.mxu0 0.0
        %770 = vmatpush1.msra.mxu0 0.0
        %771 = vmatprep.subr.mxu0 0.0
        %772 = vmatpush1.msra.mxu0 0.0
        %773 = vmatprep.subr.mxu0 0.0
        %774 = vmatpush1.msra.mxu0 0.0
        %775 = vmatprep.subr.mxu0 0.0
        %776 = vmatpush1.msra.mxu0 0.0
        %777 = vmatprep.subr.mxu0 0.0
        %778 = vmatpush1.msra.mxu0 0.0
        %779 = vmatprep.subr.mxu0 0.0
        %780 = vmatpush1.msra.mxu0 0.0
        %781 = vmatprep.subr.mxu0 0.0
        %782 = vmatpush1.msra.mxu0 0.0
        %783 = vmatprep.subr.mxu0 0.0
        %784 = vmatpush1.msra.mxu0 0.0
        %785 = vmatprep.subr.mxu0 0.0
        %786 = vmatpush1.msra.mxu0 0.0
        %787 = vmatprep.subr.mxu0 0.0
        %788 = vmatpush1.msra.mxu0 0.0
        %789 = vmatprep.subr.mxu0 0.0
        %790 = vmatpush1.msra.mxu0 0.0
        %791 = vmatprep.subr.mxu0 0.0
        %792 = vmatpush1.msra.mxu0 0.0
        %793 = vmatprep.subr.mxu0 0.0
        %794 = vmatpush1.msra.mxu0 0.0
        %795 = vmatprep.subr.mxu0 0.0
        %796 = vmatpush1.msra.mxu0 0.0
        %797 = vmatprep.subr.mxu0 0.0
        %798 = vmatpush1.msra.mxu0 0.0
        %799 = vmatprep.subr.mxu0 0.0
        %800 = vmatpush1.msra.mxu0 0.0
        %801 = vmatprep.subr.mxu0 0.0
        %802 = vmatpush1.msra.mxu0 0.0
        %803 = vmatprep.mubr.f32.mxu0 0.0
        %804 = vmatmul.mubr.f32.gmra.mrb[0].mxu0 %v737
        %v805 = vpop.f32.mrb[0].mxu0
        %v806 = vadd.f32 0.0, %v805
        %v807 = vpop.f32.mrb[0].mxu0
        %v808 = vadd.f32 0.0, %v807
        %809 = vdwg.mxu0
        %810 = vmatprep.subr.mxu0 0.0
        %811 = vmatpush1.msra.mxu0 %v729
        %812 = vmatprep.subr.mxu0 0.0
        %813 = vmatpush1.msra.mxu0 0.0
        %814 = vmatprep.subr.mxu0 0.0
        %815 = vmatpush1.msra.mxu0 0.0
        %816 = vmatprep.subr.mxu0 0.0
        %817 = vmatpush1.msra.mxu0 0.0
        %818 = vmatprep.subr.mxu0 0.0
        %819 = vmatpush1.msra.mxu0 0.0
        %820 = vmatprep.subr.mxu0 0.0
        %821 = vmatpush1.msra.mxu0 0.0
        %822 = vmatprep.subr.mxu0 0.0
        %823 = vmatpush1.msra.mxu0 0.0
        %824 = vmatprep.subr.mxu0 0.0
        %825 = vmatpush1.msra.mxu0 0.0
        %826 = vmatprep.subr.mxu0 0.0
        %827 = vmatpush1.msra.mxu0 0.0
        %828 = vmatprep.subr.mxu0 0.0
        %829 = vmatpush1.msra.mxu0 0.0
        %830 = vmatprep.subr.mxu0 0.0
        %831 = vmatpush1.msra.mxu0 0.0
        %832 = vmatprep.subr.mxu0 0.0
        %833 = vmatpush1.msra.mxu0 0.0
        %834 = vmatprep.subr.mxu0 0.0
        %835 = vmatpush1.msra.mxu0 0.0
        %836 = vmatprep.subr.mxu0 0.0
        %837 = vmatpush1.msra.mxu0 0.0
        %838 = vmatprep.subr.mxu0 0.0
        %839 = vmatpush1.msra.mxu0 0.0
        %840 = vmatprep.subr.mxu0 0.0
        %841 = vmatpush1.msra.mxu0 0.0
        %842 = vmatprep.subr.mxu0 0.0
        %843 = vmatpush1.msra.mxu0 0.0
        %844 = vmatprep.subr.mxu0 0.0
        %845 = vmatpush1.msra.mxu0 0.0
        %846 = vmatprep.subr.mxu0 0.0
        %847 = vmatpush1.msra.mxu0 0.0
        %848 = vmatprep.subr.mxu0 0.0
        %849 = vmatpush1.msra.mxu0 0.0
        %850 = vmatprep.subr.mxu0 0.0
        %851 = vmatpush1.msra.mxu0 0.0
        %852 = vmatprep.subr.mxu0 0.0
        %853 = vmatpush1.msra.mxu0 0.0
        %854 = vmatprep.subr.mxu0 0.0
        %855 = vmatpush1.msra.mxu0 0.0
        %856 = vmatprep.subr.mxu0 0.0
        %857 = vmatpush1.msra.mxu0 0.0
        %858 = vmatprep.subr.mxu0 0.0
        %859 = vmatpush1.msra.mxu0 0.0
        %860 = vmatprep.subr.mxu0 0.0
        %861 = vmatpush1.msra.mxu0 0.0
        %862 = vmatprep.subr.mxu0 0.0
        %863 = vmatpush1.msra.mxu0 0.0
        %864 = vmatprep.subr.mxu0 0.0
        %865 = vmatpush1.msra.mxu0 0.0
        %866 = vmatprep.subr.mxu0 0.0
        %867 = vmatpush1.msra.mxu0 0.0
        %868 = vmatprep.subr.mxu0 0.0
        %869 = vmatpush1.msra.mxu0 0.0
        %870 = vmatprep.subr.mxu0 0.0
        %871 = vmatpush1.msra.mxu0 0.0
        %872 = vmatprep.subr.mxu0 0.0
        %873 = vmatpush1.msra.mxu0 0.0
        %874 = vmatprep.mubr.f32.mxu0 0.0
        %875 = vmatmul.mubr.f32.gmra.mrb[0].mxu0 %v737
        %v876 = vpop.f32.mrb[0].mxu0
        %v877 = vadd.f32 0.0, %v876
        %v878 = vpop.f32.mrb[0].mxu0
        %879 = vdwg.mxu0
        %v880 = vadd.f32 %v719, %v806
        %v881 = vadd.f32 %v720, %v808
        %v882 = vadd.f32 %v721, %v877
        %s883 = scalar_lea.vmem %s1, 32
        %v884 = vld [vmem:[%s883] sm:$0xff]
        %885 = vrot.lane.b32.xlu0 %v250, 109
        %v886 = vpop.permute.xlu0 %885
        %887 = vrot.lane.b32.xlu0 %v251, 109
        %v888 = vpop.permute.xlu0 %887
        %889 = vrot.lane.b32.xlu0 %v252, 109
        %v890 = vpop.permute.xlu0 %889
        %vm891 = vcmask 891904
        %v892 = vsel %vm891, %v886, %v888
        %v893 = vsel %vm891, %v888, %v890
        %v898 = vsel %vm272, %v884, 0
        %900 = vmatprep.subr.mxu0 %v893
        %901 = vmatpush1.msra.mxu0 %v892
        %902 = vmatprep.subr.mxu0 0.0
        %903 = vmatpush1.msra.mxu0 0.0
        %904 = vmatprep.subr.mxu0 0.0
        %905 = vmatpush1.msra.mxu0 0.0
        %906 = vmatprep.subr.mxu0 0.0
        %907 = vmatpush1.msra.mxu0 0.0
        %908 = vmatprep.subr.mxu0 0.0
        %909 = vmatpush1.msra.mxu0 0.0
        %910 = vmatprep.subr.mxu0 0.0
        %911 = vmatpush1.msra.mxu0 0.0
        %912 = vmatprep.subr.mxu0 0.0
        %913 = vmatpush1.msra.mxu0 0.0
        %914 = vmatprep.subr.mxu0 0.0
        %915 = vmatpush1.msra.mxu0 0.0
        %916 = vmatprep.subr.mxu0 0.0
        %917 = vmatpush1.msra.mxu0 0.0
        %918 = vmatprep.subr.mxu0 0.0
        %919 = vmatpush1.msra.mxu0 0.0
        %920 = vmatprep.subr.mxu0 0.0
        %921 = vmatpush1.msra.mxu0 0.0
        %922 = vmatprep.subr.mxu0 0.0
        %923 = vmatpush1.msra.mxu0 0.0
        %924 = vmatprep.subr.mxu0 0.0
        %925 = vmatpush1.msra.mxu0 0.0
        %926 = vmatprep.subr.mxu0 0.0
        %927 = vmatpush1.msra.mxu0 0.0
        %928 = vmatprep.subr.mxu0 0.0
        %929 = vmatpush1.msra.mxu0 0.0
        %930 = vmatprep.subr.mxu0 0.0
        %931 = vmatpush1.msra.mxu0 0.0
        %932 = vmatprep.subr.mxu0 0.0
        %933 = vmatpush1.msra.mxu0 0.0
        %934 = vmatprep.subr.mxu0 0.0
        %935 = vmatpush1.msra.mxu0 0.0
        %936 = vmatprep.subr.mxu0 0.0
        %937 = vmatpush1.msra.mxu0 0.0
        %938 = vmatprep.subr.mxu0 0.0
        %939 = vmatpush1.msra.mxu0 0.0
        %940 = vmatprep.subr.mxu0 0.0
        %941 = vmatpush1.msra.mxu0 0.0
        %942 = vmatprep.subr.mxu0 0.0
        %943 = vmatpush1.msra.mxu0 0.0
        %944 = vmatprep.subr.mxu0 0.0
        %945 = vmatpush1.msra.mxu0 0.0
        %946 = vmatprep.subr.mxu0 0.0
        %947 = vmatpush1.msra.mxu0 0.0
        %948 = vmatprep.subr.mxu0 0.0
        %949 = vmatpush1.msra.mxu0 0.0
        %950 = vmatprep.subr.mxu0 0.0
        %951 = vmatpush1.msra.mxu0 0.0
        %952 = vmatprep.subr.mxu0 0.0
        %953 = vmatpush1.msra.mxu0 0.0
        %954 = vmatprep.subr.mxu0 0.0
        %955 = vmatpush1.msra.mxu0 0.0
        %956 = vmatprep.subr.mxu0 0.0
        %957 = vmatpush1.msra.mxu0 0.0
        %958 = vmatprep.subr.mxu0 0.0
        %959 = vmatpush1.msra.mxu0 0.0
        %960 = vmatprep.subr.mxu0 0.0
        %961 = vmatpush1.msra.mxu0 0.0
        %962 = vmatprep.subr.mxu0 0.0
        %963 = vmatpush1.msra.mxu0 0.0
        %964 = vmatprep.mubr.f32.mxu0 0.0
        %965 = vmatmul.mubr.f32.gmra.mrb[0].mxu0 %v898
        %v966 = vpop.f32.mrb[0].mxu0
        %v967 = vadd.f32 0.0, %v966
        %v968 = vpop.f32.mrb[0].mxu0
        %v969 = vadd.f32 0.0, %v968
        %970 = vdwg.mxu0
        %971 = vmatprep.subr.mxu0 0.0
        %972 = vmatpush1.msra.mxu0 %v890
        %973 = vmatprep.subr.mxu0 0.0
        %974 = vmatpush1.msra.mxu0 0.0
        %975 = vmatprep.subr.mxu0 0.0
        %976 = vmatpush1.msra.mxu0 0.0
        %977 = vmatprep.subr.mxu0 0.0
        %978 = vmatpush1.msra.mxu0 0.0
        %979 = vmatprep.subr.mxu0 0.0
        %980 = vmatpush1.msra.mxu0 0.0
        %981 = vmatprep.subr.mxu0 0.0
        %982 = vmatpush1.msra.mxu0 0.0
        %983 = vmatprep.subr.mxu0 0.0
        %984 = vmatpush1.msra.mxu0 0.0
        %985 = vmatprep.subr.mxu0 0.0
        %986 = vmatpush1.msra.mxu0 0.0
        %987 = vmatprep.subr.mxu0 0.0
        %988 = vmatpush1.msra.mxu0 0.0
        %989 = vmatprep.subr.mxu0 0.0
        %990 = vmatpush1.msra.mxu0 0.0
        %991 = vmatprep.subr.mxu0 0.0
        %992 = vmatpush1.msra.mxu0 0.0
        %993 = vmatprep.subr.mxu0 0.0
        %994 = vmatpush1.msra.mxu0 0.0
        %995 = vmatprep.subr.mxu0 0.0
        %996 = vmatpush1.msra.mxu0 0.0
        %997 = vmatprep.subr.mxu0 0.0
        %998 = vmatpush1.msra.mxu0 0.0
        %999 = vmatprep.subr.mxu0 0.0
        %1000 = vmatpush1.msra.mxu0 0.0
        %1001 = vmatprep.subr.mxu0 0.0
        %1002 = vmatpush1.msra.mxu0 0.0
        %1003 = vmatprep.subr.mxu0 0.0
        %1004 = vmatpush1.msra.mxu0 0.0
        %1005 = vmatprep.subr.mxu0 0.0
        %1006 = vmatpush1.msra.mxu0 0.0
        %1007 = vmatprep.subr.mxu0 0.0
        %1008 = vmatpush1.msra.mxu0 0.0
        %1009 = vmatprep.subr.mxu0 0.0
        %1010 = vmatpush1.msra.mxu0 0.0
        %1011 = vmatprep.subr.mxu0 0.0
        %1012 = vmatpush1.msra.mxu0 0.0
        %1013 = vmatprep.subr.mxu0 0.0
        %1014 = vmatpush1.msra.mxu0 0.0
        %1015 = vmatprep.subr.mxu0 0.0
        %1016 = vmatpush1.msra.mxu0 0.0
        %1017 = vmatprep.subr.mxu0 0.0
        %1018 = vmatpush1.msra.mxu0 0.0
        %1019 = vmatprep.subr.mxu0 0.0
        %1020 = vmatpush1.msra.mxu0 0.0
        %1021 = vmatprep.subr.mxu0 0.0
        %1022 = vmatpush1.msra.mxu0 0.0
        %1023 = vmatprep.subr.mxu0 0.0
        %1024 = vmatpush1.msra.mxu0 0.0
        %1025 = vmatprep.subr.mxu0 0.0
        %1026 = vmatpush1.msra.mxu0 0.0
        %1027 = vmatprep.subr.mxu0 0.0
        %1028 = vmatpush1.msra.mxu0 0.0
        %1029 = vmatprep.subr.mxu0 0.0
        %1030 = vmatpush1.msra.mxu0 0.0
        %1031 = vmatprep.subr.mxu0 0.0
        %1032 = vmatpush1.msra.mxu0 0.0
        %1033 = vmatprep.subr.mxu0 0.0
        %1034 = vmatpush1.msra.mxu0 0.0
        %1035 = vmatprep.mubr.f32.mxu0 0.0
        %1036 = vmatmul.mubr.f32.gmra.mrb[0].mxu0 %v898
        %v1037 = vpop.f32.mrb[0].mxu0
        %v1038 = vadd.f32 0.0, %v1037
        %v1039 = vpop.f32.mrb[0].mxu0
        %1040 = vdwg.mxu0
        %v1041 = vadd.f32 %v880, %v967
        %v1042 = vadd.f32 %v881, %v969
        %v1043 = vadd.f32 %v882, %v1038
        %s1044 = scalar_lea.vmem %s1, 40
        %v1045 = vld [vmem:[%s1044] sm:$0xff]
        %1046 = vrot.lane.b32.xlu0 %v250, 108
        %v1047 = vpop.permute.xlu0 %1046
        %1048 = vrot.lane.b32.xlu0 %v251, 108
        %v1049 = vpop.permute.xlu0 %1048
        %1050 = vrot.lane.b32.xlu0 %v252, 108
        %v1051 = vpop.permute.xlu0 %1050
        %vm1052 = vcmask 883712
        %v1053 = vsel %vm1052, %v1047, %v1049
        %v1054 = vsel %vm1052, %v1049, %v1051
        %v1059 = vsel %vm272, %v1045, 0
        %1061 = vmatprep.subr.mxu0 %v1054
        %1062 = vmatpush1.msra.mxu0 %v1053
        %1063 = vmatprep.subr.mxu0 0.0
        %1064 = vmatpush1.msra.mxu0 0.0
        %1065 = vmatprep.subr.mxu0 0.0
        %1066 = vmatpush1.msra.mxu0 0.0
        %1067 = vmatprep.subr.mxu0 0.0
        %1068 = vmatpush1.msra.mxu0 0.0
        %1069 = vmatprep.subr.mxu0 0.0
        %1070 = vmatpush1.msra.mxu0 0.0
        %1071 = vmatprep.subr.mxu0 0.0
        %1072 = vmatpush1.msra.mxu0 0.0
        %1073 = vmatprep.subr.mxu0 0.0
        %1074 = vmatpush1.msra.mxu0 0.0
        %1075 = vmatprep.subr.mxu0 0.0
        %1076 = vmatpush1.msra.mxu0 0.0
        %1077 = vmatprep.subr.mxu0 0.0
        %1078 = vmatpush1.msra.mxu0 0.0
        %1079 = vmatprep.subr.mxu0 0.0
        %1080 = vmatpush1.msra.mxu0 0.0
        %1081 = vmatprep.subr.mxu0 0.0
        %1082 = vmatpush1.msra.mxu0 0.0
        %1083 = vmatprep.subr.mxu0 0.0
        %1084 = vmatpush1.msra.mxu0 0.0
        %1085 = vmatprep.subr.mxu0 0.0
        %1086 = vmatpush1.msra.mxu0 0.0
        %1087 = vmatprep.subr.mxu0 0.0
        %1088 = vmatpush1.msra.mxu0 0.0
        %1089 = vmatprep.subr.mxu0 0.0
        %1090 = vmatpush1.msra.mxu0 0.0
        %1091 = vmatprep.subr.mxu0 0.0
        %1092 = vmatpush1.msra.mxu0 0.0
        %1093 = vmatprep.subr.mxu0 0.0
        %1094 = vmatpush1.msra.mxu0 0.0
        %1095 = vmatprep.subr.mxu0 0.0
        %1096 = vmatpush1.msra.mxu0 0.0
        %1097 = vmatprep.subr.mxu0 0.0
        %1098 = vmatpush1.msra.mxu0 0.0
        %1099 = vmatprep.subr.mxu0 0.0
        %1100 = vmatpush1.msra.mxu0 0.0
        %1101 = vmatprep.subr.mxu0 0.0
        %1102 = vmatpush1.msra.mxu0 0.0
        %1103 = vmatprep.subr.mxu0 0.0
        %1104 = vmatpush1.msra.mxu0 0.0
        %1105 = vmatprep.subr.mxu0 0.0
        %1106 = vmatpush1.msra.mxu0 0.0
        %1107 = vmatprep.subr.mxu0 0.0
        %1108 = vmatpush1.msra.mxu0 0.0
        %1109 = vmatprep.subr.mxu0 0.0
        %1110 = vmatpush1.msra.mxu0 0.0
        %1111 = vmatprep.subr.mxu0 0.0
        %1112 = vmatpush1.msra.mxu0 0.0
        %1113 = vmatprep.subr.mxu0 0.0
        %1114 = vmatpush1.msra.mxu0 0.0
        %1115 = vmatprep.subr.mxu0 0.0
        %1116 = vmatpush1.msra.mxu0 0.0
        %1117 = vmatprep.subr.mxu0 0.0
        %1118 = vmatpush1.msra.mxu0 0.0
        %1119 = vmatprep.subr.mxu0 0.0
        %1120 = vmatpush1.msra.mxu0 0.0
        %1121 = vmatprep.subr.mxu0 0.0
        %1122 = vmatpush1.msra.mxu0 0.0
        %1123 = vmatprep.subr.mxu0 0.0
        %1124 = vmatpush1.msra.mxu0 0.0
        %1125 = vmatprep.mubr.f32.mxu0 0.0
        %1126 = vmatmul.mubr.f32.gmra.mrb[0].mxu0 %v1059
        %v1127 = vpop.f32.mrb[0].mxu0
        %v1128 = vadd.f32 0.0, %v1127
        %v1129 = vpop.f32.mrb[0].mxu0
        %v1130 = vadd.f32 0.0, %v1129
        %1131 = vdwg.mxu0
        %1132 = vmatprep.subr.mxu0 0.0
        %1133 = vmatpush1.msra.mxu0 %v1051
        %1134 = vmatprep.subr.mxu0 0.0
        %1135 = vmatpush1.msra.mxu0 0.0
        %1136 = vmatprep.subr.mxu0 0.0
        %1137 = vmatpush1.msra.mxu0 0.0
        %1138 = vmatprep.subr.mxu0 0.0
        %1139 = vmatpush1.msra.mxu0 0.0
        %1140 = vmatprep.subr.mxu0 0.0
        %1141 = vmatpush1.msra.mxu0 0.0
        %1142 = vmatprep.subr.mxu0 0.0
        %1143 = vmatpush1.msra.mxu0 0.0
        %1144 = vmatprep.subr.mxu0 0.0
        %1145 = vmatpush1.msra.mxu0 0.0
        %1146 = vmatprep.subr.mxu0 0.0
        %1147 = vmatpush1.msra.mxu0 0.0
        %1148 = vmatprep.subr.mxu0 0.0
        %1149 = vmatpush1.msra.mxu0 0.0
        %1150 = vmatprep.subr.mxu0 0.0
        %1151 = vmatpush1.msra.mxu0 0.0
        %1152 = vmatprep.subr.mxu0 0.0
        %1153 = vmatpush1.msra.mxu0 0.0
        %1154 = vmatprep.subr.mxu0 0.0
        %1155 = vmatpush1.msra.mxu0 0.0
        %1156 = vmatprep.subr.mxu0 0.0
        %1157 = vmatpush1.msra.mxu0 0.0
        %1158 = vmatprep.subr.mxu0 0.0
        %1159 = vmatpush1.msra.mxu0 0.0
        %1160 = vmatprep.subr.mxu0 0.0
        %1161 = vmatpush1.msra.mxu0 0.0
        %1162 = vmatprep.subr.mxu0 0.0
        %1163 = vmatpush1.msra.mxu0 0.0
        %1164 = vmatprep.subr.mxu0 0.0
        %1165 = vmatpush1.msra.mxu0 0.0
        %1166 = vmatprep.subr.mxu0 0.0
        %1167 = vmatpush1.msra.mxu0 0.0
        %1168 = vmatprep.subr.mxu0 0.0
        %1169 = vmatpush1.msra.mxu0 0.0
        %1170 = vmatprep.subr.mxu0 0.0
        %1171 = vmatpush1.msra.mxu0 0.0
        %1172 = vmatprep.subr.mxu0 0.0
        %1173 = vmatpush1.msra.mxu0 0.0
        %1174 = vmatprep.subr.mxu0 0.0
        %1175 = vmatpush1.msra.mxu0 0.0
        %1176 = vmatprep.subr.mxu0 0.0
        %1177 = vmatpush1.msra.mxu0 0.0
        %1178 = vmatprep.subr.mxu0 0.0
        %1179 = vmatpush1.msra.mxu0 0.0
        %1180 = vmatprep.subr.mxu0 0.0
        %1181 = vmatpush1.msra.mxu0 0.0
        %1182 = vmatprep.subr.mxu0 0.0
        %1183 = vmatpush1.msra.mxu0 0.0
        %1184 = vmatprep.subr.mxu0 0.0
        %1185 = vmatpush1.msra.mxu0 0.0
        %1186 = vmatprep.subr.mxu0 0.0
        %1187 = vmatpush1.msra.mxu0 0.0
        %1188 = vmatprep.subr.mxu0 0.0
        %1189 = vmatpush1.msra.mxu0 0.0
        %1190 = vmatprep.subr.mxu0 0.0
        %1191 = vmatpush1.msra.mxu0 0.0
        %1192 = vmatprep.subr.mxu0 0.0
        %1193 = vmatpush1.msra.mxu0 0.0
        %1194 = vmatprep.subr.mxu0 0.0
        %1195 = vmatpush1.msra.mxu0 0.0
        %1196 = vmatprep.mubr.f32.mxu0 0.0
        %1197 = vmatmul.mubr.f32.gmra.mrb[0].mxu0 %v1059
        %v1198 = vpop.f32.mrb[0].mxu0
        %v1199 = vadd.f32 0.0, %v1198
        %v1200 = vpop.f32.mrb[0].mxu0
        %1201 = vdwg.mxu0
        %v1202 = vadd.f32 %v1041, %v1128
        %v1203 = vadd.f32 %v1042, %v1130
        %v1204 = vadd.f32 %v1043, %v1199
        %s1205 = scalar_lea.vmem %s1, 48
        %v1206 = vld [vmem:[%s1205] sm:$0xff]
        %1207 = vrot.lane.b32.xlu0 %v250, 92
        %v1208 = vpop.permute.xlu0 %1207
        %1209 = vrot.lane.b32.xlu0 %v251, 92
        %v1210 = vpop.permute.xlu0 %1209
        %1211 = vrot.lane.b32.xlu0 %v252, 92
        %v1212 = vpop.permute.xlu0 %1211
        %vm1213 = vcmask 752640
        %v1214 = vsel %vm1213, %v1208, %v1210
        %v1215 = vsel %vm1213, %v1210, %v1212
        %v1220 = vsel %vm272, %v1206, 0
        %1222 = vmatprep.subr.mxu0 %v1215
        %1223 = vmatpush1.msra.mxu0 %v1214
        %1224 = vmatprep.subr.mxu0 0.0
        %1225 = vmatpush1.msra.mxu0 0.0
        %1226 = vmatprep.subr.mxu0 0.0
        %1227 = vmatpush1.msra.mxu0 0.0
        %1228 = vmatprep.subr.mxu0 0.0
        %1229 = vmatpush1.msra.mxu0 0.0
        %1230 = vmatprep.subr.mxu0 0.0
        %1231 = vmatpush1.msra.mxu0 0.0
        %1232 = vmatprep.subr.mxu0 0.0
        %1233 = vmatpush1.msra.mxu0 0.0
        %1234 = vmatprep.subr.mxu0 0.0
        %1235 = vmatpush1.msra.mxu0 0.0
        %1236 = vmatprep.subr.mxu0 0.0
        %1237 = vmatpush1.msra.mxu0 0.0
        %1238 = vmatprep.subr.mxu0 0.0
        %1239 = vmatpush1.msra.mxu0 0.0
        %1240 = vmatprep.subr.mxu0 0.0
        %1241 = vmatpush1.msra.mxu0 0.0
        %1242 = vmatprep.subr.mxu0 0.0
        %1243 = vmatpush1.msra.mxu0 0.0
        %1244 = vmatprep.subr.mxu0 0.0
        %1245 = vmatpush1.msra.mxu0 0.0
        %1246 = vmatprep.subr.mxu0 0.0
        %1247 = vmatpush1.msra.mxu0 0.0
        %1248 = vmatprep.subr.mxu0 0.0
        %1249 = vmatpush1.msra.mxu0 0.0
        %1250 = vmatprep.subr.mxu0 0.0
        %1251 = vmatpush1.msra.mxu0 0.0
        %1252 = vmatprep.subr.mxu0 0.0
        %1253 = vmatpush1.msra.mxu0 0.0
        %1254 = vmatprep.subr.mxu0 0.0
        %1255 = vmatpush1.msra.mxu0 0.0
        %1256 = vmatprep.subr.mxu0 0.0
        %1257 = vmatpush1.msra.mxu0 0.0
        %1258 = vmatprep.subr.mxu0 0.0
        %1259 = vmatpush1.msra.mxu0 0.0
        %1260 = vmatprep.subr.mxu0 0.0
        %1261 = vmatpush1.msra.mxu0 0.0
        %1262 = vmatprep.subr.mxu0 0.0
        %1263 = vmatpush1.msra.mxu0 0.0
        %1264 = vmatprep.subr.mxu0 0.0
        %1265 = vmatpush1.msra.mxu0 0.0
        %1266 = vmatprep.subr.mxu0 0.0
        %1267 = vmatpush1.msra.mxu0 0.0
        %1268 = vmatprep.subr.mxu0 0.0
        %1269 = vmatpush1.msra.mxu0 0.0
        %1270 = vmatprep.subr.mxu0 0.0
        %1271 = vmatpush1.msra.mxu0 0.0
        %1272 = vmatprep.subr.mxu0 0.0
        %1273 = vmatpush1.msra.mxu0 0.0
        %1274 = vmatprep.subr.mxu0 0.0
        %1275 = vmatpush1.msra.mxu0 0.0
        %1276 = vmatprep.subr.mxu0 0.0
        %1277 = vmatpush1.msra.mxu0 0.0
        %1278 = vmatprep.subr.mxu0 0.0
        %1279 = vmatpush1.msra.mxu0 0.0
        %1280 = vmatprep.subr.mxu0 0.0
        %1281 = vmatpush1.msra.mxu0 0.0
        %1282 = vmatprep.subr.mxu0 0.0
        %1283 = vmatpush1.msra.mxu0 0.0
        %1284 = vmatprep.subr.mxu0 0.0
        %1285 = vmatpush1.msra.mxu0 0.0
        %1286 = vmatprep.mubr.f32.mxu0 0.0
        %1287 = vmatmul.mubr.f32.gmra.mrb[0].mxu0 %v1220
        %v1288 = vpop.f32.mrb[0].mxu0
        %v1289 = vadd.f32 0.0, %v1288
        %v1290 = vpop.f32.mrb[0].mxu0
        %v1291 = vadd.f32 0.0, %v1290
        %1292 = vdwg.mxu0
        %1293 = vmatprep.subr.mxu0 0.0
        %1294 = vmatpush1.msra.mxu0 %v1212
        %1295 = vmatprep.subr.mxu0 0.0
        %1296 = vmatpush1.msra.mxu0 0.0
        %1297 = vmatprep.subr.mxu0 0.0
        %1298 = vmatpush1.msra.mxu0 0.0
        %1299 = vmatprep.subr.mxu0 0.0
        %1300 = vmatpush1.msra.mxu0 0.0
        %1301 = vmatprep.subr.mxu0 0.0
        %1302 = vmatpush1.msra.mxu0 0.0
        %1303 = vmatprep.subr.mxu0 0.0
        %1304 = vmatpush1.msra.mxu0 0.0
        %1305 = vmatprep.subr.mxu0 0.0
        %1306 = vmatpush1.msra.mxu0 0.0
        %1307 = vmatprep.subr.mxu0 0.0
        %1308 = vmatpush1.msra.mxu0 0.0
        %1309 = vmatprep.subr.mxu0 0.0
        %1310 = vmatpush1.msra.mxu0 0.0
        %1311 = vmatprep.subr.mxu0 0.0
        %1312 = vmatpush1.msra.mxu0 0.0
        %1313 = vmatprep.subr.mxu0 0.0
        %1314 = vmatpush1.msra.mxu0 0.0
        %1315 = vmatprep.subr.mxu0 0.0
        %1316 = vmatpush1.msra.mxu0 0.0
        %1317 = vmatprep.subr.mxu0 0.0
        %1318 = vmatpush1.msra.mxu0 0.0
        %1319 = vmatprep.subr.mxu0 0.0
        %1320 = vmatpush1.msra.mxu0 0.0
        %1321 = vmatprep.subr.mxu0 0.0
        %1322 = vmatpush1.msra.mxu0 0.0
        %1323 = vmatprep.subr.mxu0 0.0
        %1324 = vmatpush1.msra.mxu0 0.0
        %1325 = vmatprep.subr.mxu0 0.0
        %1326 = vmatpush1.msra.mxu0 0.0
        %1327 = vmatprep.subr.mxu0 0.0
        %1328 = vmatpush1.msra.mxu0 0.0
        %1329 = vmatprep.subr.mxu0 0.0
        %1330 = vmatpush1.msra.mxu0 0.0
        %1331 = vmatprep.subr.mxu0 0.0
        %1332 = vmatpush1.msra.mxu0 0.0
        %1333 = vmatprep.subr.mxu0 0.0
        %1334 = vmatpush1.msra.mxu0 0.0
        %1335 = vmatprep.subr.mxu0 0.0
        %1336 = vmatpush1.msra.mxu0 0.0
        %1337 = vmatprep.subr.mxu0 0.0
        %1338 = vmatpush1.msra.mxu0 0.0
        %1339 = vmatprep.subr.mxu0 0.0
        %1340 = vmatpush1.msra.mxu0 0.0
        %1341 = vmatprep.subr.mxu0 0.0
        %1342 = vmatpush1.msra.mxu0 0.0
        %1343 = vmatprep.subr.mxu0 0.0
        %1344 = vmatpush1.msra.mxu0 0.0
        %1345 = vmatprep.subr.mxu0 0.0
        %1346 = vmatpush1.msra.mxu0 0.0
        %1347 = vmatprep.subr.mxu0 0.0
        %1348 = vmatpush1.msra.mxu0 0.0
        %1349 = vmatprep.subr.mxu0 0.0
        %1350 = vmatpush1.msra.mxu0 0.0
        %1351 = vmatprep.subr.mxu0 0.0
        %1352 = vmatpush1.msra.mxu0 0.0
        %1353 = vmatprep.subr.mxu0 0.0
        %1354 = vmatpush1.msra.mxu0 0.0
        %1355 = vmatprep.subr.mxu0 0.0
        %1356 = vmatpush1.msra.mxu0 0.0
        %1357 = vmatprep.mubr.f32.mxu0 0.0
        %1358 = vmatmul.mubr.f32.gmra.mrb[0].mxu0 %v1220
        %v1359 = vpop.f32.mrb[0].mxu0
        %v1360 = vadd.f32 0.0, %v1359
        %v1361 = vpop.f32.mrb[0].mxu0
        %1362 = vdwg.mxu0
        %v1363 = vadd.f32 %v1202, %v1289
        %v1364 = vadd.f32 %v1203, %v1291
        %v1365 = vadd.f32 %v1204, %v1360
        %s1366 = scalar_lea.vmem %s1, 56
        %v1367 = vld [vmem:[%s1366] sm:$0xff]
        %1368 = vrot.lane.b32.xlu0 %v250, 91
        %v1369 = vpop.permute.xlu0 %1368
        %1370 = vrot.lane.b32.xlu0 %v251, 91
        %v1371 = vpop.permute.xlu0 %1370
        %1372 = vrot.lane.b32.xlu0 %v252, 91
        %v1373 = vpop.permute.xlu0 %1372
        %vm1374 = vcmask 744448
        %v1375 = vsel %vm1374, %v1369, %v1371
        %v1376 = vsel %vm1374, %v1371, %v1373
        %v1381 = vsel %vm272, %v1367, 0
        %1383 = vmatprep.subr.mxu0 %v1376
        %1384 = vmatpush1.msra.mxu0 %v1375
        %1385 = vmatprep.subr.mxu0 0.0
        %1386 = vmatpush1.msra.mxu0 0.0
        %1387 = vmatprep.subr.mxu0 0.0
        %1388 = vmatpush1.msra.mxu0 0.0
        %1389 = vmatprep.subr.mxu0 0.0
        %1390 = vmatpush1.msra.mxu0 0.0
        %1391 = vmatprep.subr.mxu0 0.0
        %1392 = vmatpush1.msra.mxu0 0.0
        %1393 = vmatprep.subr.mxu0 0.0
        %1394 = vmatpush1.msra.mxu0 0.0
        %1395 = vmatprep.subr.mxu0 0.0
        %1396 = vmatpush1.msra.mxu0 0.0
        %1397 = vmatprep.subr.mxu0 0.0
        %1398 = vmatpush1.msra.mxu0 0.0
        %1399 = vmatprep.subr.mxu0 0.0
        %1400 = vmatpush1.msra.mxu0 0.0
        %1401 = vmatprep.subr.mxu0 0.0
        %1402 = vmatpush1.msra.mxu0 0.0
        %1403 = vmatprep.subr.mxu0 0.0
        %1404 = vmatpush1.msra.mxu0 0.0
        %1405 = vmatprep.subr.mxu0 0.0
        %1406 = vmatpush1.msra.mxu0 0.0
        %1407 = vmatprep.subr.mxu0 0.0
        %1408 = vmatpush1.msra.mxu0 0.0
        %1409 = vmatprep.subr.mxu0 0.0
        %1410 = vmatpush1.msra.mxu0 0.0
        %1411 = vmatprep.subr.mxu0 0.0
        %1412 = vmatpush1.msra.mxu0 0.0
        %1413 = vmatprep.subr.mxu0 0.0
        %1414 = vmatpush1.msra.mxu0 0.0
        %1415 = vmatprep.subr.mxu0 0.0
        %1416 = vmatpush1.msra.mxu0 0.0
        %1417 = vmatprep.subr.mxu0 0.0
        %1418 = vmatpush1.msra.mxu0 0.0
        %1419 = vmatprep.subr.mxu0 0.0
        %1420 = vmatpush1.msra.mxu0 0.0
        %1421 = vmatprep.subr.mxu0 0.0
        %1422 = vmatpush1.msra.mxu0 0.0
        %1423 = vmatprep.subr.mxu0 0.0
        %1424 = vmatpush1.msra.mxu0 0.0
        %1425 = vmatprep.subr.mxu0 0.0
        %1426 = vmatpush1.msra.mxu0 0.0
        %1427 = vmatprep.subr.mxu0 0.0
        %1428 = vmatpush1.msra.mxu0 0.0
        %1429 = vmatprep.subr.mxu0 0.0
        %1430 = vmatpush1.msra.mxu0 0.0
        %1431 = vmatprep.subr.mxu0 0.0
        %1432 = vmatpush1.msra.mxu0 0.0
        %1433 = vmatprep.subr.mxu0 0.0
        %1434 = vmatpush1.msra.mxu0 0.0
        %1435 = vmatprep.subr.mxu0 0.0
        %1436 = vmatpush1.msra.mxu0 0.0
        %1437 = vmatprep.subr.mxu0 0.0
        %1438 = vmatpush1.msra.mxu0 0.0
        %1439 = vmatprep.subr.mxu0 0.0
        %1440 = vmatpush1.msra.mxu0 0.0
        %1441 = vmatprep.subr.mxu0 0.0
        %1442 = vmatpush1.msra.mxu0 0.0
        %1443 = vmatprep.subr.mxu0 0.0
        %1444 = vmatpush1.msra.mxu0 0.0
        %1445 = vmatprep.subr.mxu0 0.0
        %1446 = vmatpush1.msra.mxu0 0.0
        %1447 = vmatprep.mubr.f32.mxu0 0.0
        %1448 = vmatmul.mubr.f32.gmra.mrb[0].mxu0 %v1381
        %v1449 = vpop.f32.mrb[0].mxu0
        %v1450 = vadd.f32 0.0, %v1449
        %v1451 = vpop.f32.mrb[0].mxu0
        %v1452 = vadd.f32 0.0, %v1451
        %1453 = vdwg.mxu0
        %1454 = vmatprep.subr.mxu0 0.0
        %1455 = vmatpush1.msra.mxu0 %v1373
        %1456 = vmatprep.subr.mxu0 0.0
        %1457 = vmatpush1.msra.mxu0 0.0
        %1458 = vmatprep.subr.mxu0 0.0
        %1459 = vmatpush1.msra.mxu0 0.0
        %1460 = vmatprep.subr.mxu0 0.0
        %1461 = vmatpush1.msra.mxu0 0.0
        %1462 = vmatprep.subr.mxu0 0.0
        %1463 = vmatpush1.msra.mxu0 0.0
        %1464 = vmatprep.subr.mxu0 0.0
        %1465 = vmatpush1.msra.mxu0 0.0
        %1466 = vmatprep.subr.mxu0 0.0
        %1467 = vmatpush1.msra.mxu0 0.0
        %1468 = vmatprep.subr.mxu0 0.0
        %1469 = vmatpush1.msra.mxu0 0.0
        %1470 = vmatprep.subr.mxu0 0.0
        %1471 = vmatpush1.msra.mxu0 0.0
        %1472 = vmatprep.subr.mxu0 0.0
        %1473 = vmatpush1.msra.mxu0 0.0
        %1474 = vmatprep.subr.mxu0 0.0
        %1475 = vmatpush1.msra.mxu0 0.0
        %1476 = vmatprep.subr.mxu0 0.0
        %1477 = vmatpush1.msra.mxu0 0.0
        %1478 = vmatprep.subr.mxu0 0.0
        %1479 = vmatpush1.msra.mxu0 0.0
        %1480 = vmatprep.subr.mxu0 0.0
        %1481 = vmatpush1.msra.mxu0 0.0
        %1482 = vmatprep.subr.mxu0 0.0
        %1483 = vmatpush1.msra.mxu0 0.0
        %1484 = vmatprep.subr.mxu0 0.0
        %1485 = vmatpush1.msra.mxu0 0.0
        %1486 = vmatprep.subr.mxu0 0.0
        %1487 = vmatpush1.msra.mxu0 0.0
        %1488 = vmatprep.subr.mxu0 0.0
        %1489 = vmatpush1.msra.mxu0 0.0
        %1490 = vmatprep.subr.mxu0 0.0
        %1491 = vmatpush1.msra.mxu0 0.0
        %1492 = vmatprep.subr.mxu0 0.0
        %1493 = vmatpush1.msra.mxu0 0.0
        %1494 = vmatprep.subr.mxu0 0.0
        %1495 = vmatpush1.msra.mxu0 0.0
        %1496 = vmatprep.subr.mxu0 0.0
        %1497 = vmatpush1.msra.mxu0 0.0
        %1498 = vmatprep.subr.mxu0 0.0
        %1499 = vmatpush1.msra.mxu0 0.0
        %1500 = vmatprep.subr.mxu0 0.0
        %1501 = vmatpush1.msra.mxu0 0.0
        %1502 = vmatprep.subr.mxu0 0.0
        %1503 = vmatpush1.msra.mxu0 0.0
        %1504 = vmatprep.subr.mxu0 0.0
        %1505 = vmatpush1.msra.mxu0 0.0
        %1506 = vmatprep.subr.mxu0 0.0
        %1507 = vmatpush1.msra.mxu0 0.0
        %1508 = vmatprep.subr.mxu0 0.0
        %1509 = vmatpush1.msra.mxu0 0.0
        %1510 = vmatprep.subr.mxu0 0.0
        %1511 = vmatpush1.msra.mxu0 0.0
        %1512 = vmatprep.subr.mxu0 0.0
        %1513 = vmatpush1.msra.mxu0 0.0
        %1514 = vmatprep.subr.mxu0 0.0
        %1515 = vmatpush1.msra.mxu0 0.0
        %1516 = vmatprep.subr.mxu0 0.0
        %1517 = vmatpush1.msra.mxu0 0.0
        %1518 = vmatprep.mubr.f32.mxu0 0.0
        %1519 = vmatmul.mubr.f32.gmra.mrb[0].mxu0 %v1381
        %v1520 = vpop.f32.mrb[0].mxu0
        %v1521 = vadd.f32 0.0, %v1520
        %v1522 = vpop.f32.mrb[0].mxu0
        %1523 = vdwg.mxu0
        %v1524 = vadd.f32 %v1363, %v1450
        %v1525 = vadd.f32 %v1364, %v1452
        %v1526 = vadd.f32 %v1365, %v1521
        %s1527 = scalar_lea.vmem %s1, 64
        %v1528 = vld [vmem:[%s1527] sm:$0xff]
        %1529 = vrot.lane.b32.xlu0 %v250, 90
        %v1530 = vpop.permute.xlu0 %1529
        %1531 = vrot.lane.b32.xlu0 %v251, 90
        %v1532 = vpop.permute.xlu0 %1531
        %1533 = vrot.lane.b32.xlu0 %v252, 90
        %v1534 = vpop.permute.xlu0 %1533
        %vm1535 = vcmask 736256
        %v1536 = vsel %vm1535, %v1530, %v1532
        %v1537 = vsel %vm1535, %v1532, %v1534
        %v1542 = vsel %vm272, %v1528, 0
        %1544 = vmatprep.subr.mxu0 %v1537
        %1545 = vmatpush1.msra.mxu0 %v1536
        %1546 = vmatprep.subr.mxu0 0.0
        %1547 = vmatpush1.msra.mxu0 0.0
        %1548 = vmatprep.subr.mxu0 0.0
        %1549 = vmatpush1.msra.mxu0 0.0
        %1550 = vmatprep.subr.mxu0 0.0
        %1551 = vmatpush1.msra.mxu0 0.0
        %1552 = vmatprep.subr.mxu0 0.0
        %1553 = vmatpush1.msra.mxu0 0.0
        %1554 = vmatprep.subr.mxu0 0.0
        %1555 = vmatpush1.msra.mxu0 0.0
        %1556 = vmatprep.subr.mxu0 0.0
        %1557 = vmatpush1.msra.mxu0 0.0
        %1558 = vmatprep.subr.mxu0 0.0
        %1559 = vmatpush1.msra.mxu0 0.0
        %1560 = vmatprep.subr.mxu0 0.0
        %1561 = vmatpush1.msra.mxu0 0.0
        %1562 = vmatprep.subr.mxu0 0.0
        %1563 = vmatpush1.msra.mxu0 0.0
        %1564 = vmatprep.subr.mxu0 0.0
        %1565 = vmatpush1.msra.mxu0 0.0
        %1566 = vmatprep.subr.mxu0 0.0
        %1567 = vmatpush1.msra.mxu0 0.0
        %1568 = vmatprep.subr.mxu0 0.0
        %1569 = vmatpush1.msra.mxu0 0.0
        %1570 = vmatprep.subr.mxu0 0.0
        %1571 = vmatpush1.msra.mxu0 0.0
        %1572 = vmatprep.subr.mxu0 0.0
        %1573 = vmatpush1.msra.mxu0 0.0
        %1574 = vmatprep.subr.mxu0 0.0
        %1575 = vmatpush1.msra.mxu0 0.0
        %1576 = vmatprep.subr.mxu0 0.0
        %1577 = vmatpush1.msra.mxu0 0.0
        %1578 = vmatprep.subr.mxu0 0.0
        %1579 = vmatpush1.msra.mxu0 0.0
        %1580 = vmatprep.subr.mxu0 0.0
        %1581 = vmatpush1.msra.mxu0 0.0
        %1582 = vmatprep.subr.mxu0 0.0
        %1583 = vmatpush1.msra.mxu0 0.0
        %1584 = vmatprep.subr.mxu0 0.0
        %1585 = vmatpush1.msra.mxu0 0.0
        %1586 = vmatprep.subr.mxu0 0.0
        %1587 = vmatpush1.msra.mxu0 0.0
        %1588 = vmatprep.subr.mxu0 0.0
        %1589 = vmatpush1.msra.mxu0 0.0
        %1590 = vmatprep.subr.mxu0 0.0
        %1591 = vmatpush1.msra.mxu0 0.0
        %1592 = vmatprep.subr.mxu0 0.0
        %1593 = vmatpush1.msra.mxu0 0.0
        %1594 = vmatprep.subr.mxu0 0.0
        %1595 = vmatpush1.msra.mxu0 0.0
        %1596 = vmatprep.subr.mxu0 0.0
        %1597 = vmatpush1.msra.mxu0 0.0
        %1598 = vmatprep.subr.mxu0 0.0
        %1599 = vmatpush1.msra.mxu0 0.0
        %1600 = vmatprep.subr.mxu0 0.0
        %1601 = vmatpush1.msra.mxu0 0.0
        %1602 = vmatprep.subr.mxu0 0.0
        %1603 = vmatpush1.msra.mxu0 0.0
        %1604 = vmatprep.subr.mxu0 0.0
        %1605 = vmatpush1.msra.mxu0 0.0
        %1606 = vmatprep.subr.mxu0 0.0
        %1607 = vmatpush1.msra.mxu0 0.0
        %1608 = vmatprep.mubr.f32.mxu0 0.0
        %1609 = vmatmul.mubr.f32.gmra.mrb[0].mxu0 %v1542
        %v1610 = vpop.f32.mrb[0].mxu0
        %v1611 = vadd.f32 0.0, %v1610
        %v1612 = vpop.f32.mrb[0].mxu0
        %v1613 = vadd.f32 0.0, %v1612
        %1614 = vdwg.mxu0
        %1615 = vmatprep.subr.mxu0 0.0
        %1616 = vmatpush1.msra.mxu0 %v1534
        %1617 = vmatprep.subr.mxu0 0.0
        %1618 = vmatpush1.msra.mxu0 0.0
        %1619 = vmatprep.subr.mxu0 0.0
        %1620 = vmatpush1.msra.mxu0 0.0
        %1621 = vmatprep.subr.mxu0 0.0
        %1622 = vmatpush1.msra.mxu0 0.0
        %1623 = vmatprep.subr.mxu0 0.0
        %1624 = vmatpush1.msra.mxu0 0.0
        %1625 = vmatprep.subr.mxu0 0.0
        %1626 = vmatpush1.msra.mxu0 0.0
        %1627 = vmatprep.subr.mxu0 0.0
        %1628 = vmatpush1.msra.mxu0 0.0
        %1629 = vmatprep.subr.mxu0 0.0
        %1630 = vmatpush1.msra.mxu0 0.0
        %1631 = vmatprep.subr.mxu0 0.0
        %1632 = vmatpush1.msra.mxu0 0.0
        %1633 = vmatprep.subr.mxu0 0.0
        %1634 = vmatpush1.msra.mxu0 0.0
        %1635 = vmatprep.subr.mxu0 0.0
        %1636 = vmatpush1.msra.mxu0 0.0
        %1637 = vmatprep.subr.mxu0 0.0
        %1638 = vmatpush1.msra.mxu0 0.0
        %1639 = vmatprep.subr.mxu0 0.0
        %1640 = vmatpush1.msra.mxu0 0.0
        %1641 = vmatprep.subr.mxu0 0.0
        %1642 = vmatpush1.msra.mxu0 0.0
        %1643 = vmatprep.subr.mxu0 0.0
        %1644 = vmatpush1.msra.mxu0 0.0
        %1645 = vmatprep.subr.mxu0 0.0
        %1646 = vmatpush1.msra.mxu0 0.0
        %1647 = vmatprep.subr.mxu0 0.0
        %1648 = vmatpush1.msra.mxu0 0.0
        %1649 = vmatprep.subr.mxu0 0.0
        %1650 = vmatpush1.msra.mxu0 0.0
        %1651 = vmatprep.subr.mxu0 0.0
        %1652 = vmatpush1.msra.mxu0 0.0
        %1653 = vmatprep.subr.mxu0 0.0
        %1654 = vmatpush1.msra.mxu0 0.0
        %1655 = vmatprep.subr.mxu0 0.0
        %1656 = vmatpush1.msra.mxu0 0.0
        %1657 = vmatprep.subr.mxu0 0.0
        %1658 = vmatpush1.msra.mxu0 0.0
        %1659 = vmatprep.subr.mxu0 0.0
        %1660 = vmatpush1.msra.mxu0 0.0
        %1661 = vmatprep.subr.mxu0 0.0
        %1662 = vmatpush1.msra.mxu0 0.0
        %1663 = vmatprep.subr.mxu0 0.0
        %1664 = vmatpush1.msra.mxu0 0.0
        %1665 = vmatprep.subr.mxu0 0.0
        %1666 = vmatpush1.msra.mxu0 0.0
        %1667 = vmatprep.subr.mxu0 0.0
        %1668 = vmatpush1.msra.mxu0 0.0
        %1669 = vmatprep.subr.mxu0 0.0
        %1670 = vmatpush1.msra.mxu0 0.0
        %1671 = vmatprep.subr.mxu0 0.0
        %1672 = vmatpush1.msra.mxu0 0.0
        %1673 = vmatprep.subr.mxu0 0.0
        %1674 = vmatpush1.msra.mxu0 0.0
        %1675 = vmatprep.subr.mxu0 0.0
        %1676 = vmatpush1.msra.mxu0 0.0
        %1677 = vmatprep.subr.mxu0 0.0
        %1678 = vmatpush1.msra.mxu0 0.0
        %1679 = vmatprep.mubr.f32.mxu0 0.0
        %1680 = vmatmul.mubr.f32.gmra.mrb[0].mxu0 %v1542
        %v1681 = vpop.f32.mrb[0].mxu0
        %v1682 = vadd.f32 0.0, %v1681
        %v1683 = vpop.f32.mrb[0].mxu0
        %1684 = vdwg.mxu0
        %v1685 = vadd.f32 %v1524, %v1611
        %v1686 = vadd.f32 %v1525, %v1613
        %v1687 = vadd.f32 %v1526, %v1682
        %v1688 = vld [vmem:[%s2] sm:$0xff]
        %1690 = vset.pattern.permute.xlu0 0
        %1691 = vperm.xlu0 %1690, %v1688
        %v1692 = vpop.permute.xlu0 %1691
        %v1694 = vadd.f32 %v1685, %v1692
        %v1695 = vadd.f32 %v1686, %v1692
        %v1696 = vadd.f32 %v1687, %v1692
        %v1698 = vlaneseq
        %v1699 = vshrl.u32 %v1698, 7
        %v1700 = vsub.s32 0, %v1699
        %v1701 = vrot.slane %v253, %v1700
        %v1702 = vlaneseq
        %v1703 = vshrl.u32 %v1702, 7
        %v1704 = vsub.s32 1, %v1703
        %v1705 = vrot.slane %v253, %v1704
        %v1706 = vlaneseq
        %v1707 = vshrl.u32 %v1706, 7
        %v1708 = vsub.s32 2, %v1707
        %v1709 = vrot.slane %v253, %v1708
        %v1713 = vmul.f32 %v1694, %v1701
        %v1714 = vmul.f32 %v1695, %v1705
        %v1715 = vmul.f32 %v1696, %v1709
        %v1716 = vadd.f32 %v1713, %v1714
        %vm1717 = vcmask 261120
        %v1718 = vsel %vm1717, %v1715, 0.0
        %v1719 = vadd.f32 %v1716, %v1718
        %1720 = vadd.xlane.f32.xlu0 %v1719
        %v1721 = vpop.xlane.xlu0 %1720
        %v1722 = vmul.f32 %v1721, 0.00390625
        %v1723 = vsub.f32 %v1694, %v1722
        %v1724 = vsub.f32 %v1695, %v1722
        %v1725 = vsub.f32 %v1696, %v1722
        %v1726 = vmul.f32 %v1723, %v1723
        %v1727 = vmul.f32 %v1724, %v1724
        %v1728 = vmul.f32 %v1725, %v1725
        %v1729 = vmul.f32 %v1726, %v1701
        %v1730 = vmul.f32 %v1727, %v1705
        %v1731 = vmul.f32 %v1728, %v1709
        %v1732 = vadd.f32 %v1729, %v1730
        %v1733 = vsel %vm1717, %v1731, 0.0
        %v1734 = vadd.f32 %v1732, %v1733
        %1735 = vadd.xlane.f32.xlu0 %v1734
        %v1736 = vpop.xlane.xlu0 %1735
        %v1737 = vmul.f32 %v1736, 0.00390625
        %v1738 = vadd.f32 %v1737, 1e-05
        %v1739 = vrsqrt.pop %v1738
        %v1740 = vmul.f32 %v1723, %v1739
        %v1741 = vmul.f32 %v1724, %v1739
        %v1742 = vmul.f32 %v1725, %v1739
        %v1743 = vld [vmem:[%s3] sm:$0xff]
        %1745 = vset.pattern.permute.xlu0 0
        %1746 = vperm.xlu0 %1745, %v1743
        %v1747 = vpop.permute.xlu0 %1746
        %v1749 = vmul.f32 %v1740, %v1747
        %v1750 = vmul.f32 %v1741, %v1747
        %v1751 = vmul.f32 %v1742, %v1747
        %v1752 = vld [vmem:[%s4] sm:$0xff]
        %1754 = vset.pattern.permute.xlu0 0
        %1755 = vperm.xlu0 %1754, %v1752
        %v1756 = vpop.permute.xlu0 %1755
        %v1758 = vadd.f32 %v1749, %v1756
        %v1759 = vadd.f32 %v1750, %v1756
        %v1760 = vadd.f32 %v1751, %v1756
        %vm1761 = vcmp.ge.f32.partialorder %v1758, 0.0
        %vm1762 = vcmp.ge.f32.partialorder %v1759, 0.0
        %vm1763 = vcmp.ge.f32.partialorder %v1760, 0.0
        %v1764 = vmul.f32 %v1758, 0.01
        %v1765 = vmul.f32 %v1759, 0.01
        %v1766 = vmul.f32 %v1760, 0.01
        %v1767 = vsel %vm1761, %v1758, %v1764
        %v1768 = vsel %vm1762, %v1759, %v1765
        %v1769 = vsel %vm1763, %v1760, %v1766
        %1770 = vst [vmem:[%s244] sm:$0xff] %v1767
        %1771 = vst [vmem:[%s244 + $0x8] sm:$0xff] %v1768
        %1772 = vst.msk [vmem:[%s244 + $0x10] sm:$0xff] %vm1717, %v1769
        %s1773 = sand.u32 %s159, 1
        %s1774 = scalar_lea.sflag [#allocation3], %s1773
        %s1775 = sand.u32 %s159, 1
        %s1776 = smul.addr %s1775, 24
        %s1777 = scalar_lea.vmem [#allocation2], %s1776
        // Predicated region
        $region45: #{tpu_custom_call.1} parent=43 // pred_check
          %p1778 = pneg %p169
        $region46: #{tpu_custom_call.1} parent=43 // pred_check_branch
          %1780 = sbr.rel (%p1778) target = $region48
        $region47: #{tpu_custom_call.1} parent=43 // pred_region
          %s1782 = ssub.s32 384, 384
          %1783 = vsyncadd %s1774, %s1782
          %s1784 = smul.addr %s20, 3
          %s1785 = smul.addr %s1784, 128
          %s1786 = scalar_lea.hbm %s6, %s1785
          %s1788 = sshll.u32 %s1777, 4
          %s1789 = int_to_ptr.vmem [resolvable:$true] %s1788
          %1791 = dma.vmem_to_hbm [thread:$0]  %s1789, 384, %s1786, %s1774
        $region48: #{tpu_custom_call.1} parent=43 // pred_fallthru
          _
      $region44: #{tpu_custom_call.1} parent=5 // pred_fallthru
        _
      %p1792 = scmp.le.s32.totalorder 2, %s15
      // Predicated region
      $region49: #{tpu_custom_call.1} parent=5 // pred_check
        %p1793 = pneg %p1792
      $region50: #{tpu_custom_call.1} parent=5 // pred_check_branch
        %1795 = sbr.rel (%p1793) target = $region52
      $region51: #{tpu_custom_call.1} parent=5 // pred_region
        %s1796 = ssub.s32 %s15, 2
        // Predicated region
        $region53: #{tpu_custom_call.1} parent=51 // pred_check
          %p1797 = pneg %p175
        $region54: #{tpu_custom_call.1} parent=51 // pred_check_branch
          %1799 = sbr.rel (%p1797) target = $region56
        $region55: #{tpu_custom_call.1} parent=51 // pred_region
          %s1800 = sand.u32 %s160, 1
          %s1801 = scalar_lea.sflag [#allocation3], %s1800
          %s1802 = sand.u32 %s160, 1
          %s1803 = smul.addr %s1802, 24
          %s1804 = scalar_lea.vmem [#allocation2], %s1803
          %1805 = dma.done %s1801, 384
        $region56: #{tpu_custom_call.1} parent=51 // pred_fallthru
          _
      $region52: #{tpu_custom_call.1} parent=5 // pred_fallthru
        _
    $region6: #{tpu_custom_call.1} parent=1 // loop_footer
      %s19 = sadd.s32 1, %s15
    $region7: #{tpu_custom_call.1} parent=1 // loop_footer_branch
      %14 = sbr.rel target = $region3
    $region8: #{tpu_custom_call.1} parent=1 // loop_exit
      _
    %1806 = vsyncpa [#allocation3], 1
    %s1807 = scalar_lea.sflag [#allocation3], 1
    %1808 = vsyncpa %s1807, 1

</llo_original>
